<compile_context>
chip_gen: v7x
topology: tpu7x:2x2x1
jax: 0.10.0
libtpu: 0.0.40
codegen_flags: <defaults>
</compile_context>

<pallas_src>
import functools

import jax
import jax.numpy as jnp
from jax.experimental import pallas as pl
from jax.experimental.pallas import tpu as pltpu


def _round_up(n: int, m: int) -> int:
    return ((n + m - 1) // m) * m


def _nr_kernel(x_ref, w1_ref, b1_ref, w2_ref, b2_ref, feat_ref):
    # x_ref:    (C,  TN)   f32 input block (channels-first, lane-dense)
    # w1_ref:   (K,  C)    f32  BN1-folded conv1 weight
    # b1_ref:   (K,  1)    f32  BN1-folded bias
    # w2_ref:   (K,  K)    bf16 BN2-folded conv2 weight
    # b2_ref:   (K,  1)    f32  BN2-folded bias
    # feat_ref: (K,  TN)   output block
    x = x_ref[...].astype(jnp.float32)            # (C, TN)
    w1 = w1_ref[...]                              # (K, C)
    c_in = x_ref.shape[0]                         # static (3)

    # conv1: contraction depth 3 -> VPU broadcast FMAs (keeps the MXU free).
    h = w1[:, 0:1] * x[0:1, :]
    for c in range(1, c_in):
        h = h + w1[:, c:c + 1] * x[c:c + 1, :]
    h = jnp.maximum(h + b1_ref[...], 0.0)         # f32 bias + ReLU on VPU

    # conv2: 64x64 matmul on the MXU, bf16 operands, f32 accumulation.
    f = jnp.dot(w2_ref[...], h.astype(w2_ref.dtype),
                preferred_element_type=jnp.float32)
    f = jnp.maximum(f + b2_ref[...], 0.0)         # f32 bias + ReLU on VPU

    feat_ref[...] = f.astype(feat_ref.dtype)


def nr_process_forward(x, params, *, tn=8192, eps=1e-5, mxu_dtype=jnp.bfloat16):
    """x: (B, C, N) channels-first.  Returns features (B, dimk, N)."""
    B, C, N = x.shape
    K = params["w1"].shape[0]  # dimk

    # ---- fold BatchNorm (eval) into conv weights / biases (convs are bias-free) ----
    s1 = params["bn1_gamma"] * jax.lax.rsqrt(params["bn1_var"] + eps)      # (K,)
    w1_eff = (params["w1"] * s1[:, None]).astype(jnp.float32)              # (K, C)
    b1_eff = (params["bn1_beta"] - params["bn1_mean"] * s1).astype(jnp.float32)
    s2 = params["bn2_gamma"] * jax.lax.rsqrt(params["bn2_var"] + eps)
    w2_eff = (params["w2"] * s2[:, None]).astype(mxu_dtype)                # (K, K)
    b2_eff = (params["bn2_beta"] - params["bn2_mean"] * s2).astype(jnp.float32)

    # ---- lane-dense tile over N (multiple of 128); no padding, grid clips ----
    tn_eff = min(int(tn), _round_up(N, 128))
    tn_eff = max(128, _round_up(tn_eff, 128))
    if B == 1:
        # keep >=2 grid steps on a 'parallel' axis for 2-TC chips (v7x)
        tn_eff = min(tn_eff, max(128, _round_up(pl.cdiv(N, 2), 128)))

    grid = (B, pl.cdiv(N, tn_eff))
    const = lambda b, j: (0, 0)
    tile = lambda b, j: (b, 0, j)

    out_dtype = x.dtype
    flops = 2 * B * N * (K * C + K * K)
    bytes_accessed = (B * N * C * x.dtype.itemsize
                      + B * N * K * jnp.dtype(out_dtype).itemsize
                      + K * C * 4 + 2 * K * 4 + K * K * jnp.dtype(mxu_dtype).itemsize)

    feat = pl.pallas_call(
        _nr_kernel,
        out_shape=jax.ShapeDtypeStruct((B, K, N), out_dtype),
        grid_spec=pltpu.PrefetchScalarGridSpec(
            num_scalar_prefetch=0,
            grid=grid,
            in_specs=[
                pl.BlockSpec((None, C, tn_eff), tile),   # x block (C, TN)
                pl.BlockSpec((K, C), const),             # w1_eff
                pl.BlockSpec((K, 1), const),             # b1_eff
                pl.BlockSpec((K, K), const),             # w2_eff
                pl.BlockSpec((K, 1), const),             # b2_eff
            ],
            out_specs=pl.BlockSpec((None, K, tn_eff), tile),
        ),
        compiler_params=pltpu.CompilerParams(
            dimension_semantics=("parallel", "parallel"),
        ),
        cost_estimate=pl.CostEstimate(
            flops=flops, transcendentals=0, bytes_accessed=bytes_accessed),
    )(x, w1_eff, b1_eff[:, None], w2_eff, b2_eff[:, None])

    return feat


def make_params(key, dim_input=3, dimk=64):
    ks = jax.random.split(key, 10)
    scale = 0.1
    return {
        # Conv1d(kernel=1, bias=False) weights stored as (out_ch, in_ch)
        "w1": scale * jax.random.normal(ks[0], (dimk, dim_input), jnp.float32),
        "w2": scale * jax.random.normal(ks[1], (dimk, dimk), jnp.float32),
        # BatchNorm1d (eval) params / running stats
        "bn1_gamma": 1.0 + 0.1 * jax.random.normal(ks[2], (dimk,), jnp.float32),
        "bn1_beta": 0.1 * jax.random.normal(ks[3], (dimk,), jnp.float32),
        "bn1_mean": 0.1 * jax.random.normal(ks[4], (dimk,), jnp.float32),
        "bn1_var": jnp.abs(1.0 + 0.1 * jax.random.normal(ks[5], (dimk,), jnp.float32)),
        "bn2_gamma": 1.0 + 0.1 * jax.random.normal(ks[6], (dimk,), jnp.float32),
        "bn2_beta": 0.1 * jax.random.normal(ks[7], (dimk,), jnp.float32),
        "bn2_mean": 0.1 * jax.random.normal(ks[8], (dimk,), jnp.float32),
        "bn2_var": jnp.abs(1.0 + 0.1 * jax.random.normal(ks[9], (dimk,), jnp.float32)),
    }


def reference_forward(x, params, eps=1e-5):
    """Plain-JAX f32 reference mirroring the PyTorch forward (eval mode)."""
    def conv1x1(w, inp):                    # w: (Co, Ci), inp: (B, Ci, N)
        return jnp.einsum("oc,bcn->bon", w, inp)

    def bn(g, bta, m, v, inp):
        return (inp - m[None, :, None]) * jax.lax.rsqrt(v[None, :, None] + eps) \
            * g[None, :, None] + bta[None, :, None]

    h = jax.nn.relu(bn(params["bn1_gamma"], params["bn1_beta"],
                       params["bn1_mean"], params["bn1_var"],
                       conv1x1(params["w1"], x)))
    f = jax.nn.relu(bn(params["bn2_gamma"], params["bn2_beta"],
                       params["bn2_mean"], params["bn2_var"],
                       conv1x1(params["w2"], h)))
    return f


if __name__ == "__main__":
    # Shapes consistent with the module: B=2 point clouds, 3 input channels,
    # dimk=64 feature channels, N=1024 points.
    B, C, K, N = 2, 3, 64, 1024
    key = jax.random.PRNGKey(0)
    kx, kp = jax.random.split(key)

    x = jax.random.normal(kx, (B, C, N), jnp.float32)
    params = make_params(kp, C, K)

    fwd = jax.jit(functools.partial(nr_process_forward, tn=8192))

    feat = jax.block_until_ready(fwd(x, params))
    feat_ref = reference_forward(x, params)
    assert feat.shape == (B, K, N)
    # conv2 MXU operands are bf16 (f32 accumulation), so tolerance is bf16-level.
    assert jnp.allclose(feat, feat_ref, rtol=1e-2, atol=5e-3)

    # Ragged N exercises the cdiv grid / clipped last tile (no wrapper padding).
    x2 = jax.random.normal(kx, (B, C, 1000), jnp.float32)
    feat2 = jax.block_until_ready(fwd(x2, params))
    assert feat2.shape == (B, K, 1000)
    assert jnp.allclose(feat2, reference_forward(x2, params), rtol=1e-2, atol=5e-3)

    print("KERNEL_OK")
</pallas_src>

<mosaic_0001>
module attributes {stable_mosaic.version = 11 : i64} {
  func.func @_nr_kernel(%arg0: i32, %arg1: i32, %arg2: memref<1x3x1024xf32, #tpu.memory_space<vmem>>, %arg3: memref<64x3xf32, #tpu.memory_space<vmem>>, %arg4: memref<64x1xf32, #tpu.memory_space<vmem>>, %arg5: memref<64x64xbf16, #tpu.memory_space<vmem>>, %arg6: memref<64x1xf32, #tpu.memory_space<vmem>>, %arg7: memref<1x64x1024xf32, #tpu.memory_space<vmem>>) attributes {dimension_semantics = [#tpu.dimension_semantics<parallel>, #tpu.dimension_semantics<parallel>], iteration_bounds = array<i64: 2, 1>, scalar_prefetch = 0 : i64, scratch_operands = 0 : i64, tpu.core_type = #tpu.core_type<tc>, window_params = [{transform_indices = @transform_0, window_bounds = array<i64: 1, 3, 1024>}, {pipeline_mode = #tpu.pipeline_mode<synchronous>, transform_indices = @transform_1, window_bounds = array<i64: 64, 3>}, {pipeline_mode = #tpu.pipeline_mode<synchronous>, transform_indices = @transform_2, window_bounds = array<i64: 64, 1>}, {pipeline_mode = #tpu.pipeline_mode<synchronous>, transform_indices = @transform_3, window_bounds = array<i64: 64, 64>}, {pipeline_mode = #tpu.pipeline_mode<synchronous>, transform_indices = @transform_4, window_bounds = array<i64: 64, 1>}, {transform_indices = @transform_5, window_bounds = array<i64: 1, 64, 1024>}]} {
    %c0 = arith.constant 0 : index
    %c0_0 = arith.constant 0 : index
    %c0_1 = arith.constant 0 : index
    %0 = vector.load %arg2[%c0, %c0_0, %c0_1] : memref<1x3x1024xf32, #tpu.memory_space<vmem>>, vector<1x3x1024xf32>
    %1 = vector.shape_cast %0 : vector<1x3x1024xf32> to vector<3x1024xf32>
    %c0_2 = arith.constant 0 : index
    %c0_3 = arith.constant 0 : index
    %2 = vector.load %arg3[%c0_2, %c0_3] : memref<64x3xf32, #tpu.memory_space<vmem>>, vector<64x3xf32>
    %3 = vector.extract_strided_slice %2 {offsets = [0, 0], sizes = [64, 1], strides = [1, 1]} : vector<64x3xf32> to vector<64x1xf32>
    %4 = vector.extract_strided_slice %1 {offsets = [0, 0], sizes = [1, 1024], strides = [1, 1]} : vector<3x1024xf32> to vector<1x1024xf32>
    %5 = vector.broadcast %3 : vector<64x1xf32> to vector<64x1024xf32>
    %6 = vector.broadcast %4 : vector<1x1024xf32> to vector<64x1024xf32>
    %7 = arith.mulf %5, %6 : vector<64x1024xf32>
    %8 = vector.extract_strided_slice %2 {offsets = [0, 1], sizes = [64, 1], strides = [1, 1]} : vector<64x3xf32> to vector<64x1xf32>
    %9 = vector.extract_strided_slice %1 {offsets = [1, 0], sizes = [1, 1024], strides = [1, 1]} : vector<3x1024xf32> to vector<1x1024xf32>
    %10 = vector.broadcast %8 : vector<64x1xf32> to vector<64x1024xf32>
    %11 = vector.broadcast %9 : vector<1x1024xf32> to vector<64x1024xf32>
    %12 = arith.mulf %10, %11 : vector<64x1024xf32>
    %13 = arith.addf %7, %12 : vector<64x1024xf32>
    %14 = vector.extract_strided_slice %2 {offsets = [0, 2], sizes = [64, 1], strides = [1, 1]} : vector<64x3xf32> to vector<64x1xf32>
    %15 = vector.extract_strided_slice %1 {offsets = [2, 0], sizes = [1, 1024], strides = [1, 1]} : vector<3x1024xf32> to vector<1x1024xf32>
    %16 = vector.broadcast %14 : vector<64x1xf32> to vector<64x1024xf32>
    %17 = vector.broadcast %15 : vector<1x1024xf32> to vector<64x1024xf32>
    %18 = arith.mulf %16, %17 : vector<64x1024xf32>
    %19 = arith.addf %13, %18 : vector<64x1024xf32>
    %c0_4 = arith.constant 0 : index
    %c0_5 = arith.constant 0 : index
    %20 = vector.load %arg4[%c0_4, %c0_5] : memref<64x1xf32, #tpu.memory_space<vmem>>, vector<64x1xf32>
    %21 = vector.broadcast %20 : vector<64x1xf32> to vector<64x1024xf32>
    %22 = arith.addf %19, %21 : vector<64x1024xf32>
    %cst = arith.constant 0.000000e+00 : f32
    %23 = vector.broadcast %cst : f32 to vector<64x1024xf32>
    %24 = arith.maximumf %22, %23 : vector<64x1024xf32>
    %c0_6 = arith.constant 0 : index
    %c0_7 = arith.constant 0 : index
    %25 = vector.load %arg5[%c0_6, %c0_7] : memref<64x64xbf16, #tpu.memory_space<vmem>>, vector<64x64xbf16>
    %26 = arith.truncf %24 : vector<64x1024xf32> to vector<64x1024xbf16>
    %cst_8 = arith.constant dense<0.000000e+00> : vector<64x1024xf32>
    %27 = tpu.matmul %25, %26, %cst_8 {dimension_numbers = #tpu.dot_dimension_numbers<[1], [0], [0], [1], [0, 0, 1, 1], [], []>} : vector<64x64xbf16>, vector<64x1024xbf16>, vector<64x1024xf32> -> vector<64x1024xf32>
    %c0_9 = arith.constant 0 : index
    %c0_10 = arith.constant 0 : index
    %28 = vector.load %arg6[%c0_9, %c0_10] : memref<64x1xf32, #tpu.memory_space<vmem>>, vector<64x1xf32>
    %29 = vector.broadcast %28 : vector<64x1xf32> to vector<64x1024xf32>
    %30 = arith.addf %27, %29 : vector<64x1024xf32>
    %cst_11 = arith.constant 0.000000e+00 : f32
    %31 = vector.broadcast %cst_11 : f32 to vector<64x1024xf32>
    %32 = arith.maximumf %30, %31 : vector<64x1024xf32>
    %c0_12 = arith.constant 0 : index
    %c0_13 = arith.constant 0 : index
    %c0_14 = arith.constant 0 : index
    %33 = vector.load %arg7[%c0_12, %c0_13, %c0_14] : memref<1x64x1024xf32, #tpu.memory_space<vmem>>, vector<1x64x1024xf32>
    %34 = vector.shape_cast %33 : vector<1x64x1024xf32> to vector<64x1024xf32>
    %35 = vector.shape_cast %32 : vector<64x1024xf32> to vector<1x64x1024xf32>
    tpu.vector_store %arg7[%c0_12, %c0_13, %c0_14], %35 {strides = array<i32>} : memref<1x64x1024xf32, #tpu.memory_space<vmem>>, vector<1x64x1024xf32>,
    return
  }
  func.func @transform_0(%arg0: i32, %arg1: i32) -> (i32, i32, i32) {
    %c0_i32 = arith.constant 0 : i32
    %c0_i32_0 = arith.constant 0 : i32
    return %arg0, %c0_i32, %arg1 : i32, i32, i32
  }
  func.func @transform_1(%arg0: i32, %arg1: i32) -> (i32, i32) {
    %c0_i32 = arith.constant 0 : i32
    %c0_i32_0 = arith.constant 0 : i32
    %c0_i32_1 = arith.constant 0 : i32
    return %c0_i32, %c0_i32_0 : i32, i32
  }
  func.func @transform_2(%arg0: i32, %arg1: i32) -> (i32, i32) {
    %c0_i32 = arith.constant 0 : i32
    %c0_i32_0 = arith.constant 0 : i32
    %c0_i32_1 = arith.constant 0 : i32
    return %c0_i32, %c0_i32_0 : i32, i32
  }
  func.func @transform_3(%arg0: i32, %arg1: i32) -> (i32, i32) {
    %c0_i32 = arith.constant 0 : i32
    %c0_i32_0 = arith.constant 0 : i32
    %c0_i32_1 = arith.constant 0 : i32
    return %c0_i32, %c0_i32_0 : i32, i32
  }
  func.func @transform_4(%arg0: i32, %arg1: i32) -> (i32, i32) {
    %c0_i32 = arith.constant 0 : i32
    %c0_i32_0 = arith.constant 0 : i32
    %c0_i32_1 = arith.constant 0 : i32
    return %c0_i32, %c0_i32_0 : i32, i32
  }
  func.func @transform_5(%arg0: i32, %arg1: i32) -> (i32, i32, i32) {
    %c0_i32 = arith.constant 0 : i32
    %c0_i32_0 = arith.constant 0 : i32
    return %arg0, %c0_i32, %arg1 : i32, i32, i32
  }
}

</mosaic_0001>

<llo_original>
// kernel: nr_process_forward.1
$region0: #{nr_process_forward.1}
  #allocation0 [shape = 'u32[]', space=smem, size = 0x4, offset = 0x4, fixed_abs, tag = 'smem constant byte address 0x4 - core index']
  #allocation1 [shape = 'u32[144,128]{1,0:T(1,128)}', space=vmem, size = 0x12000, scoped, tag = 'internal scratch']
  %s0 = inlined_call_operand.vmem [shape: f32[2,3,1024], index: 0, kind: input, shape index: {}]
  %s1 = inlined_call_operand.vmem [shape: f32[64,3], index: 1, kind: input, shape index: {}]
  %s2 = inlined_call_operand.vmem [shape: f32[64,1], index: 2, kind: input, shape index: {}]
  %s3 = inlined_call_operand.vmem [shape: bf16[64,64], index: 3, kind: input, shape index: {}]
  %s4 = inlined_call_operand.vmem [shape: f32[64,1], index: 4, kind: input, shape index: {}]
  %s5 = inlined_call_operand.hbm [shape: f32[2,64,1024], index: 5, kind: output, shape index: {}]
  %s6 = sld [smem:[#allocation0]]
  $region53: #{nr_process_forward.1} parent=0
    _
  %s8 = ssub.s32 1, %s6
  %s9 = scalar_select 0, %s8, %s6
  $region1: #{nr_process_forward.1} parent=0
    #allocation2 [shape = 'u8[524288]{0}', space=vmem, size = 0x80000, scoped, tag = 'output window, operand 0']
    #allocation3 [shape = 's32[2]{0}', space=sflag, size = 0x8, scoped, tag = 'scoped memory for nr_process_forward.1']
    %10 = vsyncpa [#allocation3], 0
    %s11 = scalar_lea.sflag [#allocation3], 1
    %12 = vsyncpa %s11, 0
    loop: start=0, step=1, limit=4
    $region2: #{nr_process_forward.1} parent=1 // loop_pre_header
      _
    $region3: #{nr_process_forward.1} parent=1 // loop_header
      %s14 = sphi 0, %s18
      %p15 = scmp.ge.s32.totalorder %s14, 4
      %s21 = sphi 0, %s33
      %s22 = sphi 0, %s29
      %s23 = sphi 0, %s21
      %s24 = sphi 0, %s22
      %s25 = sphi 0, %s23
      %s26 = sphi 0, %s24
      %s38 = sphi 0, %s40
      %s41 = sphi 0, %s38
      %s42 = sphi 0, %s41
      %s58 = sphi 0, %s42
      %s62 = sphi 0, %s62
      %s64 = sphi 0, %s62
      %s65 = sphi 0, %s64
      %s79 = sphi 0, %s65
      %s83 = sphi 0, %s83
      %s85 = sphi 0, %s83
      %s86 = sphi 0, %s85
      %s100 = sphi 0, %s86
      %s104 = sphi 0, %s104
      %s106 = sphi 0, %s104
      %s107 = sphi 0, %s106
      %s121 = sphi 0, %s107
      %s125 = sphi 0, %s125
      %s127 = sphi 0, %s125
      %s128 = sphi 0, %s127
      %s142 = sphi 0, %s128
      %s150 = sphi 0, %s152
      %s153 = sphi 0, %s150
      %s154 = sphi 0, %s153
      %s170 = sphi 0, %s154
    $region4: #{nr_process_forward.1} parent=1 // loop_header_branch
      %17 = sbr.rel (%p15) target = $region8
    $region5: #{nr_process_forward.1} parent=1 // loop_body
      %s19 = ssub.s32 %s14, 1
      %s20 = ssub.s32 %s14, 2
      %s27 = sadd.s32 1, %s22
      %p28 = scmp.ge.s32.totalorder %s27, 1
      %s29 = scalar_select %p28, 0, %s27
      %s30 = sadd.s32 1, %s21
      %s31 = scalar_select %p28, %s30, %s21
      %p32 = scmp.ge.s32.totalorder %s31, 2
      %s33 = scalar_select %p32, 0, %s31
      %s34 = ssub.s32 %s21, %s33
      %s35 = ssub.s32 %s22, %s29
      %s36 = sor.u32 %s34, %s35
      %p37 = scmp.eq.s32.totalorder %s36, 0
      %s39 = sadd.s32 %s38, 1
      %s40 = scalar_select %p37, %s38, %s39
      %p43 = pneg %p37
      %p44 = scmp.eq.s32.totalorder %s14, 1
      %p45 = por %p43, %p44
      %p46 = scmp.ne.s32.totalorder %s38, %s41
      %p47 = scmp.eq.s32.totalorder %s14, 0
      %p48 = por %p46, %p47
      %p49 = scmp.ne.s32.totalorder %s38, %s41
      %p50 = scmp.eq.s32.totalorder %s19, 1
      %p51 = por %p49, %p50
      %p52 = scmp.ne.s32.totalorder %s41, %s42
      %p53 = scmp.eq.s32.totalorder %s19, 0
      %p54 = por %p52, %p53
      %p55 = scmp.ne.s32.totalorder %s41, %s42
      %p56 = scmp.eq.s32.totalorder %s20, 1
      %p57 = por %p55, %p56
      %p59 = scmp.ne.s32.totalorder %s42, %s58
      %p60 = scmp.eq.s32.totalorder %s20, 0
      %p61 = por %p59, %p60
      %s63 = sadd.s32 %s62, 1
      %p66 = scmp.eq.s32.totalorder %s14, 1
      %p67 = scmp.ne.s32.totalorder %s62, %s64
      %p68 = scmp.eq.s32.totalorder %s14, 0
      %p69 = por %p67, %p68
      %p70 = scmp.ne.s32.totalorder %s62, %s64
      %p71 = scmp.eq.s32.totalorder %s19, 1
      %p72 = por %p70, %p71
      %p73 = scmp.ne.s32.totalorder %s64, %s65
      %p74 = scmp.eq.s32.totalorder %s19, 0
      %p75 = por %p73, %p74
      %p76 = scmp.ne.s32.totalorder %s64, %s65
      %p77 = scmp.eq.s32.totalorder %s20, 1
      %p78 = por %p76, %p77
      %p80 = scmp.ne.s32.totalorder %s65, %s79
      %p81 = scmp.eq.s32.totalorder %s20, 0
      %p82 = por %p80, %p81
      %s84 = sadd.s32 %s83, 1
      %p87 = scmp.eq.s32.totalorder %s14, 1
      %p88 = scmp.ne.s32.totalorder %s83, %s85
      %p89 = scmp.eq.s32.totalorder %s14, 0
      %p90 = por %p88, %p89
      %p91 = scmp.ne.s32.totalorder %s83, %s85
      %p92 = scmp.eq.s32.totalorder %s19, 1
      %p93 = por %p91, %p92
      %p94 = scmp.ne.s32.totalorder %s85, %s86
      %p95 = scmp.eq.s32.totalorder %s19, 0
      %p96 = por %p94, %p95
      %p97 = scmp.ne.s32.totalorder %s85, %s86
      %p98 = scmp.eq.s32.totalorder %s20, 1
      %p99 = por %p97, %p98
      %p101 = scmp.ne.s32.totalorder %s86, %s100
      %p102 = scmp.eq.s32.totalorder %s20, 0
      %p103 = por %p101, %p102
      %s105 = sadd.s32 %s104, 1
      %p108 = scmp.eq.s32.totalorder %s14, 1
      %p109 = scmp.ne.s32.totalorder %s104, %s106
      %p110 = scmp.eq.s32.totalorder %s14, 0
      %p111 = por %p109, %p110
      %p112 = scmp.ne.s32.totalorder %s104, %s106
      %p113 = scmp.eq.s32.totalorder %s19, 1
      %p114 = por %p112, %p113
      %p115 = scmp.ne.s32.totalorder %s106, %s107
      %p116 = scmp.eq.s32.totalorder %s19, 0
      %p117 = por %p115, %p116
      %p118 = scmp.ne.s32.totalorder %s106, %s107
      %p119 = scmp.eq.s32.totalorder %s20, 1
      %p120 = por %p118, %p119
      %p122 = scmp.ne.s32.totalorder %s107, %s121
      %p123 = scmp.eq.s32.totalorder %s20, 0
      %p124 = por %p122, %p123
      %s126 = sadd.s32 %s125, 1
      %p129 = scmp.eq.s32.totalorder %s14, 1
      %p130 = scmp.ne.s32.totalorder %s125, %s127
      %p131 = scmp.eq.s32.totalorder %s14, 0
      %p132 = por %p130, %p131
      %p133 = scmp.ne.s32.totalorder %s125, %s127
      %p134 = scmp.eq.s32.totalorder %s19, 1
      %p135 = por %p133, %p134
      %p136 = scmp.ne.s32.totalorder %s127, %s128
      %p137 = scmp.eq.s32.totalorder %s19, 0
      %p138 = por %p136, %p137
      %p139 = scmp.ne.s32.totalorder %s127, %s128
      %p140 = scmp.eq.s32.totalorder %s20, 1
      %p141 = por %p139, %p140
      %p143 = scmp.ne.s32.totalorder %s128, %s142
      %p144 = scmp.eq.s32.totalorder %s20, 0
      %p145 = por %p143, %p144
      %s146 = ssub.s32 %s21, %s33
      %s147 = ssub.s32 %s22, %s29
      %s148 = sor.u32 %s146, %s147
      %p149 = scmp.eq.s32.totalorder %s148, 0
      %s151 = sadd.s32 %s150, 1
      %s152 = scalar_select %p149, %s150, %s151
      %p155 = pneg %p149
      %p156 = scmp.eq.s32.totalorder %s14, 1
      %p157 = por %p155, %p156
      %p158 = scmp.ne.s32.totalorder %s150, %s153
      %p159 = scmp.eq.s32.totalorder %s14, 0
      %p160 = por %p158, %p159
      %p161 = scmp.ne.s32.totalorder %s150, %s153
      %p162 = scmp.eq.s32.totalorder %s19, 1
      %p163 = por %p161, %p162
      %p164 = scmp.ne.s32.totalorder %s153, %s154
      %p165 = scmp.eq.s32.totalorder %s19, 0
      %p166 = por %p164, %p165
      %p167 = scmp.ne.s32.totalorder %s153, %s154
      %p168 = scmp.eq.s32.totalorder %s20, 1
      %p169 = por %p167, %p168
      %p171 = scmp.ne.s32.totalorder %s154, %s170
      %p172 = scmp.eq.s32.totalorder %s20, 0
      %p173 = por %p171, %p172
      %p174 = scmp.le.s32.totalorder 1, %s14
      %p175 = scmp.lt.s32.totalorder %s14, 3
      %p176 = pnand %p174, %p175
      %p177 = pneg %p176
      // Predicated region
      $region9: #{nr_process_forward.1} parent=5 // pred_check
        _
      $region10: #{nr_process_forward.1} parent=5 // pred_check_branch
        %179 = sbr.rel (%p176) target = $region12
      $region11: #{nr_process_forward.1} parent=5 // pred_region
        %s180 = ssub.s32 %s14, 1
        // Predicated region
        $region13: #{nr_process_forward.1} parent=11 // pred_check
          %p181 = pneg %p75
        $region14: #{nr_process_forward.1} parent=11 // pred_check_branch
          %183 = sbr.rel (%p181) target = $region16
        $region15: #{nr_process_forward.1} parent=11 // pred_region
          _
        $region16: #{nr_process_forward.1} parent=11 // pred_fallthru
          _
        // Predicated region
        $region17: #{nr_process_forward.1} parent=11 // pred_check
          %p184 = pneg %p96
        $region18: #{nr_process_forward.1} parent=11 // pred_check_branch
          %186 = sbr.rel (%p184) target = $region20
        $region19: #{nr_process_forward.1} parent=11 // pred_region
          _
        $region20: #{nr_process_forward.1} parent=11 // pred_fallthru
          _
        // Predicated region
        $region21: #{nr_process_forward.1} parent=11 // pred_check
          %p187 = pneg %p117
        $region22: #{nr_process_forward.1} parent=11 // pred_check_branch
          %189 = sbr.rel (%p187) target = $region24
        $region23: #{nr_process_forward.1} parent=11 // pred_region
          _
        $region24: #{nr_process_forward.1} parent=11 // pred_fallthru
          _
        // Predicated region
        $region25: #{nr_process_forward.1} parent=11 // pred_check
          %p190 = pneg %p138
        $region26: #{nr_process_forward.1} parent=11 // pred_check_branch
          %192 = sbr.rel (%p190) target = $region28
        $region27: #{nr_process_forward.1} parent=11 // pred_region
          _
        $region28: #{nr_process_forward.1} parent=11 // pred_fallthru
          _
      $region12: #{nr_process_forward.1} parent=5 // pred_fallthru
        _
      %p193 = scmp.lt.s32.totalorder %s14, 2
      // Predicated region
      $region29: #{nr_process_forward.1} parent=5 // pred_check
        %p194 = pneg %p193
      $region30: #{nr_process_forward.1} parent=5 // pred_check_branch
        %196 = sbr.rel (%p194) target = $region32
      $region31: #{nr_process_forward.1} parent=5 // pred_region
        // Predicated region
        $region33: #{nr_process_forward.1} parent=31 // pred_check
          %p197 = pneg %p48
        $region34: #{nr_process_forward.1} parent=31 // pred_check_branch
          %199 = sbr.rel (%p197) target = $region36
        $region35: #{nr_process_forward.1} parent=31 // pred_region
          %s200 = smul.u32 8, %s22
          %p201 = scmp.lt.s32.totalorder %s21, 1
          %s202 = scalar_select %p201, %s21, 1
          %p203 = scmp.lt.s32.totalorder %s200, 7
          %s204 = scalar_select %p203, %s200, 7
          %s205 = smul.addr %s202, 8
          %s206 = sadd.s32 %s204, %s205
          %s207 = smul.addr %s206, 4
          %s208 = scalar_lea.vmem %s0, %s207
          %s209 = smul.u32 8, %s22
        $region36: #{nr_process_forward.1} parent=31 // pred_fallthru
          _
      $region32: #{nr_process_forward.1} parent=5 // pred_fallthru
        _
      %p210 = scmp.le.s32.totalorder 1, %s14
      %p211 = scmp.lt.s32.totalorder %s14, 3
      %p212 = pnand %p210, %p211
      %p213 = pneg %p212
      // Predicated region
      $region37: #{nr_process_forward.1} parent=5 // pred_check
        _
      $region38: #{nr_process_forward.1} parent=5 // pred_check_branch
        %215 = sbr.rel (%p212) target = $region40
      $region39: #{nr_process_forward.1} parent=5 // pred_region
        %s216 = ssub.s32 %s14, 1
        %s217 = smul.u32 8, %s24
        %p218 = scmp.lt.s32.totalorder %s23, 1
        %s219 = scalar_select %p218, %s23, 1
        %p220 = scmp.lt.s32.totalorder %s217, 7
        %s221 = scalar_select %p220, %s217, 7
        %s222 = smul.addr %s219, 8
        %s223 = sadd.s32 %s221, %s222
        %s224 = smul.addr %s223, 4
        %s225 = scalar_lea.vmem %s0, %s224
        %p226 = pneg %p54
        %p227 = pneg %p51
        %p228 = pneg %p75
        %p229 = pneg %p72
        %p230 = pneg %p96
        %p231 = pneg %p93
        %p232 = pneg %p117
        %p233 = pneg %p114
        %p234 = pneg %p138
        %p235 = pneg %p135
        %p236 = pneg %p166
        %p237 = pneg %p163
        %s238 = sand.u32 %s153, 1
        %s239 = scalar_lea.sflag [#allocation3], %s238
        %s240 = sand.u32 %s153, 1
        %s241 = smul.addr %s240, 512
        %s242 = scalar_lea.vmem [#allocation2], %s241
        %s243 = smul.u32 8, %s24
        %p244 = scmp.lt.s32.totalorder %s23, 1
        %s245 = scalar_select %p244, %s23, 1
        %p246 = scmp.lt.s32.totalorder %s243, 7
        %s247 = scalar_select %p246, %s243, 7
        %s248 = smul.addr %s245, 8
        %s249 = sadd.s32 %s247, %s248
        %s250 = smul.addr %s249, 4
        %s251 = scalar_lea.vmem %s0, %s250
        %s252 = smul.u32 8, %s24
        %s253 = smul.u32 8, %s24
        %v255 = vld [vmem:[%s251] sm:$0x77]
        %v256 = vld [vmem:[%s251 + $0x8] sm:$0x77]
        %v257 = vld [vmem:[%s251 + $0x10] sm:$0x77]
        %v258 = vld [vmem:[%s251 + $0x18] sm:$0x77]
        %v259 = vld [vmem:[%s1] sm:$0xff]
        %v260 = vld [vmem:[%s1 + $0x8] sm:$0xff]
        %v261 = vld [vmem:[%s1 + $0x10] sm:$0xff]
        %v262 = vld [vmem:[%s1 + $0x18] sm:$0xff]
        %v263 = vld [vmem:[%s1 + $0x20] sm:$0xff]
        %v264 = vld [vmem:[%s1 + $0x28] sm:$0xff]
        %v265 = vld [vmem:[%s1 + $0x30] sm:$0xff]
        %v266 = vld [vmem:[%s1 + $0x38] sm:$0xff]
        %268 = vset.pattern.permute.xlu0 0
        %269 = vperm.xlu0 %268, %v259
        %v270 = vpop.permute.xlu0 %269
        %273 = vset.pattern.permute.xlu0 0
        %274 = vperm.xlu0 %273, %v260
        %v275 = vpop.permute.xlu0 %274
        %278 = vset.pattern.permute.xlu0 0
        %279 = vperm.xlu0 %278, %v261
        %v280 = vpop.permute.xlu0 %279
        %283 = vset.pattern.permute.xlu0 0
        %284 = vperm.xlu0 %283, %v262
        %v285 = vpop.permute.xlu0 %284
        %288 = vset.pattern.permute.xlu0 0
        %289 = vperm.xlu0 %288, %v263
        %v290 = vpop.permute.xlu0 %289
        %293 = vset.pattern.permute.xlu0 0
        %294 = vperm.xlu0 %293, %v264
        %v295 = vpop.permute.xlu0 %294
        %298 = vset.pattern.permute.xlu0 0
        %299 = vperm.xlu0 %298, %v265
        %v300 = vpop.permute.xlu0 %299
        %303 = vset.pattern.permute.xlu0 0
        %304 = vperm.xlu0 %303, %v266
        %v305 = vpop.permute.xlu0 %304
        %v311 = vlaneseq
        %v312 = vshrl.u32 %v311, 7
        %v313 = vsub.s32 0, %v312
        %v314 = vrot.slane %v255, %v313
        %v315 = vlaneseq
        %v316 = vshrl.u32 %v315, 7
        %v317 = vsub.s32 4, %v316
        %v318 = vrot.slane %v255, %v317
        %v319 = vlaneseq
        %v320 = vshrl.u32 %v319, 7
        %v321 = vsub.s32 0, %v320
        %v322 = vrot.slane %v256, %v321
        %v323 = vlaneseq
        %v324 = vshrl.u32 %v323, 7
        %v325 = vsub.s32 4, %v324
        %v326 = vrot.slane %v256, %v325
        %v327 = vlaneseq
        %v328 = vshrl.u32 %v327, 7
        %v329 = vsub.s32 0, %v328
        %v330 = vrot.slane %v257, %v329
        %v331 = vlaneseq
        %v332 = vshrl.u32 %v331, 7
        %v333 = vsub.s32 4, %v332
        %v334 = vrot.slane %v257, %v333
        %v335 = vlaneseq
        %v336 = vshrl.u32 %v335, 7
        %v337 = vsub.s32 0, %v336
        %v338 = vrot.slane %v258, %v337
        %v339 = vlaneseq
        %v340 = vshrl.u32 %v339, 7
        %v341 = vsub.s32 4, %v340
        %v342 = vrot.slane %v258, %v341
        %v351 = vlaneseq
        %v352 = vshrl.u32 %v351, 7
        %v353 = vsub.s32 0, %v352
        %v354 = vrot.slane %v314, %v353
        %v355 = vlaneseq
        %v356 = vshrl.u32 %v355, 7
        %v357 = vsub.s32 0, %v356
        %v358 = vrot.slane %v318, %v357
        %v359 = vlaneseq
        %v360 = vshrl.u32 %v359, 7
        %v361 = vsub.s32 0, %v360
        %v362 = vrot.slane %v322, %v361
        %v363 = vlaneseq
        %v364 = vshrl.u32 %v363, 7
        %v365 = vsub.s32 0, %v364
        %v366 = vrot.slane %v326, %v365
        %v367 = vlaneseq
        %v368 = vshrl.u32 %v367, 7
        %v369 = vsub.s32 0, %v368
        %v370 = vrot.slane %v330, %v369
        %v371 = vlaneseq
        %v372 = vshrl.u32 %v371, 7
        %v373 = vsub.s32 0, %v372
        %v374 = vrot.slane %v334, %v373
        %v375 = vlaneseq
        %v376 = vshrl.u32 %v375, 7
        %v377 = vsub.s32 0, %v376
        %v378 = vrot.slane %v338, %v377
        %v379 = vlaneseq
        %v380 = vshrl.u32 %v379, 7
        %v381 = vsub.s32 0, %v380
        %v382 = vrot.slane %v342, %v381
        %v383 = vmul.f32 %v270, %v354
        %v384 = vmul.f32 %v270, %v358
        %v385 = vmul.f32 %v270, %v362
        %v386 = vmul.f32 %v270, %v366
        %v387 = vmul.f32 %v270, %v370
        %v388 = vmul.f32 %v270, %v374
        %v389 = vmul.f32 %v270, %v378
        %v390 = vmul.f32 %v270, %v382
        %v391 = vmul.f32 %v275, %v354
        %v392 = vmul.f32 %v275, %v358
        %v393 = vmul.f32 %v275, %v362
        %v394 = vmul.f32 %v275, %v366
        %v395 = vmul.f32 %v275, %v370
        %v396 = vmul.f32 %v275, %v374
        %v397 = vmul.f32 %v275, %v378
        %v398 = vmul.f32 %v275, %v382
        %v399 = vmul.f32 %v280, %v354
        %v400 = vmul.f32 %v280, %v358
        %v401 = vmul.f32 %v280, %v362
        %v402 = vmul.f32 %v280, %v366
        %v403 = vmul.f32 %v280, %v370
        %v404 = vmul.f32 %v280, %v374
        %v405 = vmul.f32 %v280, %v378
        %v406 = vmul.f32 %v280, %v382
        %v407 = vmul.f32 %v285, %v354
        %v408 = vmul.f32 %v285, %v358
        %v409 = vmul.f32 %v285, %v362
        %v410 = vmul.f32 %v285, %v366
        %v411 = vmul.f32 %v285, %v370
        %v412 = vmul.f32 %v285, %v374
        %v413 = vmul.f32 %v285, %v378
        %v414 = vmul.f32 %v285, %v382
        %v415 = vmul.f32 %v290, %v354
        %v416 = vmul.f32 %v290, %v358
        %v417 = vmul.f32 %v290, %v362
        %v418 = vmul.f32 %v290, %v366
        %v419 = vmul.f32 %v290, %v370
        %v420 = vmul.f32 %v290, %v374
        %v421 = vmul.f32 %v290, %v378
        %v422 = vmul.f32 %v290, %v382
        %v423 = vmul.f32 %v295, %v354
        %v424 = vmul.f32 %v295, %v358
        %v425 = vmul.f32 %v295, %v362
        %v426 = vmul.f32 %v295, %v366
        %v427 = vmul.f32 %v295, %v370
        %v428 = vmul.f32 %v295, %v374
        %v429 = vmul.f32 %v295, %v378
        %v430 = vmul.f32 %v295, %v382
        %v431 = vmul.f32 %v300, %v354
        %v432 = vmul.f32 %v300, %v358
        %v433 = vmul.f32 %v300, %v362
        %v434 = vmul.f32 %v300, %v366
        %v435 = vmul.f32 %v300, %v370
        %v436 = vmul.f32 %v300, %v374
        %v437 = vmul.f32 %v300, %v378
        %v438 = vmul.f32 %v300, %v382
        %v439 = vmul.f32 %v305, %v354
        %v440 = vmul.f32 %v305, %v358
        %v441 = vmul.f32 %v305, %v362
        %v442 = vmul.f32 %v305, %v366
        %v443 = vmul.f32 %v305, %v370
        %v444 = vmul.f32 %v305, %v374
        %v445 = vmul.f32 %v305, %v378
        %v446 = vmul.f32 %v305, %v382
        %447 = vset.pattern.permute.xlu0 1
        %448 = vperm.xlu0 %447, %v259
        %v449 = vpop.permute.xlu0 %448
        %451 = vset.pattern.permute.xlu0 1
        %452 = vperm.xlu0 %451, %v260
        %v453 = vpop.permute.xlu0 %452
        %455 = vset.pattern.permute.xlu0 1
        %456 = vperm.xlu0 %455, %v261
        %v457 = vpop.permute.xlu0 %456
        %459 = vset.pattern.permute.xlu0 1
        %460 = vperm.xlu0 %459, %v262
        %v461 = vpop.permute.xlu0 %460
        %463 = vset.pattern.permute.xlu0 1
        %464 = vperm.xlu0 %463, %v263
        %v465 = vpop.permute.xlu0 %464
        %467 = vset.pattern.permute.xlu0 1
        %468 = vperm.xlu0 %467, %v264
        %v469 = vpop.permute.xlu0 %468
        %471 = vset.pattern.permute.xlu0 1
        %472 = vperm.xlu0 %471, %v265
        %v473 = vpop.permute.xlu0 %472
        %475 = vset.pattern.permute.xlu0 1
        %476 = vperm.xlu0 %475, %v266
        %v477 = vpop.permute.xlu0 %476
        %v479 = vlaneseq
        %v480 = vshrl.u32 %v479, 7
        %v481 = vsub.s32 1, %v480
        %v482 = vrot.slane %v255, %v481
        %v483 = vlaneseq
        %v484 = vshrl.u32 %v483, 7
        %v485 = vsub.s32 5, %v484
        %v486 = vrot.slane %v255, %v485
        %v487 = vlaneseq
        %v488 = vshrl.u32 %v487, 7
        %v489 = vsub.s32 1, %v488
        %v490 = vrot.slane %v256, %v489
        %v491 = vlaneseq
        %v492 = vshrl.u32 %v491, 7
        %v493 = vsub.s32 5, %v492
        %v494 = vrot.slane %v256, %v493
        %v495 = vlaneseq
        %v496 = vshrl.u32 %v495, 7
        %v497 = vsub.s32 1, %v496
        %v498 = vrot.slane %v257, %v497
        %v499 = vlaneseq
        %v500 = vshrl.u32 %v499, 7
        %v501 = vsub.s32 5, %v500
        %v502 = vrot.slane %v257, %v501
        %v503 = vlaneseq
        %v504 = vshrl.u32 %v503, 7
        %v505 = vsub.s32 1, %v504
        %v506 = vrot.slane %v258, %v505
        %v507 = vlaneseq
        %v508 = vshrl.u32 %v507, 7
        %v509 = vsub.s32 5, %v508
        %v510 = vrot.slane %v258, %v509
        %v519 = vlaneseq
        %v520 = vshrl.u32 %v519, 7
        %v521 = vsub.s32 1, %v520
        %v522 = vrot.slane %v482, %v521
        %v523 = vlaneseq
        %v524 = vshrl.u32 %v523, 7
        %v525 = vsub.s32 1, %v524
        %v526 = vrot.slane %v486, %v525
        %v527 = vlaneseq
        %v528 = vshrl.u32 %v527, 7
        %v529 = vsub.s32 1, %v528
        %v530 = vrot.slane %v490, %v529
        %v531 = vlaneseq
        %v532 = vshrl.u32 %v531, 7
        %v533 = vsub.s32 1, %v532
        %v534 = vrot.slane %v494, %v533
        %v535 = vlaneseq
        %v536 = vshrl.u32 %v535, 7
        %v537 = vsub.s32 1, %v536
        %v538 = vrot.slane %v498, %v537
        %v539 = vlaneseq
        %v540 = vshrl.u32 %v539, 7
        %v541 = vsub.s32 1, %v540
        %v542 = vrot.slane %v502, %v541
        %v543 = vlaneseq
        %v544 = vshrl.u32 %v543, 7
        %v545 = vsub.s32 1, %v544
        %v546 = vrot.slane %v506, %v545
        %v547 = vlaneseq
        %v548 = vshrl.u32 %v547, 7
        %v549 = vsub.s32 1, %v548
        %v550 = vrot.slane %v510, %v549
        %v551 = vmul.f32 %v449, %v522
        %v552 = vmul.f32 %v449, %v526
        %v553 = vmul.f32 %v449, %v530
        %v554 = vmul.f32 %v449, %v534
        %v555 = vmul.f32 %v449, %v538
        %v556 = vmul.f32 %v449, %v542
        %v557 = vmul.f32 %v449, %v546
        %v558 = vmul.f32 %v449, %v550
        %v559 = vmul.f32 %v453, %v522
        %v560 = vmul.f32 %v453, %v526
        %v561 = vmul.f32 %v453, %v530
        %v562 = vmul.f32 %v453, %v534
        %v563 = vmul.f32 %v453, %v538
        %v564 = vmul.f32 %v453, %v542
        %v565 = vmul.f32 %v453, %v546
        %v566 = vmul.f32 %v453, %v550
        %v567 = vmul.f32 %v457, %v522
        %v568 = vmul.f32 %v457, %v526
        %v569 = vmul.f32 %v457, %v530
        %v570 = vmul.f32 %v457, %v534
        %v571 = vmul.f32 %v457, %v538
        %v572 = vmul.f32 %v457, %v542
        %v573 = vmul.f32 %v457, %v546
        %v574 = vmul.f32 %v457, %v550
        %v575 = vmul.f32 %v461, %v522
        %v576 = vmul.f32 %v461, %v526
        %v577 = vmul.f32 %v461, %v530
        %v578 = vmul.f32 %v461, %v534
        %v579 = vmul.f32 %v461, %v538
        %v580 = vmul.f32 %v461, %v542
        %v581 = vmul.f32 %v461, %v546
        %v582 = vmul.f32 %v461, %v550
        %v583 = vmul.f32 %v465, %v522
        %v584 = vmul.f32 %v465, %v526
        %v585 = vmul.f32 %v465, %v530
        %v586 = vmul.f32 %v465, %v534
        %v587 = vmul.f32 %v465, %v538
        %v588 = vmul.f32 %v465, %v542
        %v589 = vmul.f32 %v465, %v546
        %v590 = vmul.f32 %v465, %v550
        %v591 = vmul.f32 %v469, %v522
        %v592 = vmul.f32 %v469, %v526
        %v593 = vmul.f32 %v469, %v530
        %v594 = vmul.f32 %v469, %v534
        %v595 = vmul.f32 %v469, %v538
        %v596 = vmul.f32 %v469, %v542
        %v597 = vmul.f32 %v469, %v546
        %v598 = vmul.f32 %v469, %v550
        %v599 = vmul.f32 %v473, %v522
        %v600 = vmul.f32 %v473, %v526
        %v601 = vmul.f32 %v473, %v530
        %v602 = vmul.f32 %v473, %v534
        %v603 = vmul.f32 %v473, %v538
        %v604 = vmul.f32 %v473, %v542
        %v605 = vmul.f32 %v473, %v546
        %v606 = vmul.f32 %v473, %v550
        %v607 = vmul.f32 %v477, %v522
        %v608 = vmul.f32 %v477, %v526
        %v609 = vmul.f32 %v477, %v530
        %v610 = vmul.f32 %v477, %v534
        %v611 = vmul.f32 %v477, %v538
        %v612 = vmul.f32 %v477, %v542
        %v613 = vmul.f32 %v477, %v546
        %v614 = vmul.f32 %v477, %v550
        %v615 = vadd.f32 %v383, %v551
        %v616 = vadd.f32 %v384, %v552
        %v617 = vadd.f32 %v385, %v553
        %v618 = vadd.f32 %v386, %v554
        %v619 = vadd.f32 %v387, %v555
        %v620 = vadd.f32 %v388, %v556
        %v621 = vadd.f32 %v389, %v557
        %v622 = vadd.f32 %v390, %v558
        %v623 = vadd.f32 %v391, %v559
        %v624 = vadd.f32 %v392, %v560
        %v625 = vadd.f32 %v393, %v561
        %v626 = vadd.f32 %v394, %v562
        %v627 = vadd.f32 %v395, %v563
        %v628 = vadd.f32 %v396, %v564
        %v629 = vadd.f32 %v397, %v565
        %v630 = vadd.f32 %v398, %v566
        %v631 = vadd.f32 %v399, %v567
        %v632 = vadd.f32 %v400, %v568
        %v633 = vadd.f32 %v401, %v569
        %v634 = vadd.f32 %v402, %v570
        %v635 = vadd.f32 %v403, %v571
        %v636 = vadd.f32 %v404, %v572
        %v637 = vadd.f32 %v405, %v573
        %v638 = vadd.f32 %v406, %v574
        %v639 = vadd.f32 %v407, %v575
        %v640 = vadd.f32 %v408, %v576
        %v641 = vadd.f32 %v409, %v577
        %v642 = vadd.f32 %v410, %v578
        %v643 = vadd.f32 %v411, %v579
        %v644 = vadd.f32 %v412, %v580
        %v645 = vadd.f32 %v413, %v581
        %v646 = vadd.f32 %v414, %v582
        %v647 = vadd.f32 %v415, %v583
        %v648 = vadd.f32 %v416, %v584
        %v649 = vadd.f32 %v417, %v585
        %v650 = vadd.f32 %v418, %v586
        %v651 = vadd.f32 %v419, %v587
        %v652 = vadd.f32 %v420, %v588
        %v653 = vadd.f32 %v421, %v589
        %v654 = vadd.f32 %v422, %v590
        %v655 = vadd.f32 %v423, %v591
        %v656 = vadd.f32 %v424, %v592
        %v657 = vadd.f32 %v425, %v593
        %v658 = vadd.f32 %v426, %v594
        %v659 = vadd.f32 %v427, %v595
        %v660 = vadd.f32 %v428, %v596
        %v661 = vadd.f32 %v429, %v597
        %v662 = vadd.f32 %v430, %v598
        %v663 = vadd.f32 %v431, %v599
        %v664 = vadd.f32 %v432, %v600
        %v665 = vadd.f32 %v433, %v601
        %v666 = vadd.f32 %v434, %v602
        %v667 = vadd.f32 %v435, %v603
        %v668 = vadd.f32 %v436, %v604
        %v669 = vadd.f32 %v437, %v605
        %v670 = vadd.f32 %v438, %v606
        %v671 = vadd.f32 %v439, %v607
        %v672 = vadd.f32 %v440, %v608
        %v673 = vadd.f32 %v441, %v609
        %v674 = vadd.f32 %v442, %v610
        %v675 = vadd.f32 %v443, %v611
        %v676 = vadd.f32 %v444, %v612
        %v677 = vadd.f32 %v445, %v613
        %v678 = vadd.f32 %v446, %v614
        %679 = vset.pattern.permute.xlu0 2
        %680 = vperm.xlu0 %679, %v259
        %v681 = vpop.permute.xlu0 %680
        %683 = vset.pattern.permute.xlu0 2
        %684 = vperm.xlu0 %683, %v260
        %v685 = vpop.permute.xlu0 %684
        %687 = vset.pattern.permute.xlu0 2
        %688 = vperm.xlu0 %687, %v261
        %v689 = vpop.permute.xlu0 %688
        %691 = vset.pattern.permute.xlu0 2
        %692 = vperm.xlu0 %691, %v262
        %v693 = vpop.permute.xlu0 %692
        %695 = vset.pattern.permute.xlu0 2
        %696 = vperm.xlu0 %695, %v263
        %v697 = vpop.permute.xlu0 %696
        %699 = vset.pattern.permute.xlu0 2
        %700 = vperm.xlu0 %699, %v264
        %v701 = vpop.permute.xlu0 %700
        %703 = vset.pattern.permute.xlu0 2
        %704 = vperm.xlu0 %703, %v265
        %v705 = vpop.permute.xlu0 %704
        %707 = vset.pattern.permute.xlu0 2
        %708 = vperm.xlu0 %707, %v266
        %v709 = vpop.permute.xlu0 %708
        %v711 = vlaneseq
        %v712 = vshrl.u32 %v711, 7
        %v713 = vsub.s32 2, %v712
        %v714 = vrot.slane %v255, %v713
        %v715 = vlaneseq
        %v716 = vshrl.u32 %v715, 7
        %v717 = vsub.s32 6, %v716
        %v718 = vrot.slane %v255, %v717
        %v719 = vlaneseq
        %v720 = vshrl.u32 %v719, 7
        %v721 = vsub.s32 2, %v720
        %v722 = vrot.slane %v256, %v721
        %v723 = vlaneseq
        %v724 = vshrl.u32 %v723, 7
        %v725 = vsub.s32 6, %v724
        %v726 = vrot.slane %v256, %v725
        %v727 = vlaneseq
        %v728 = vshrl.u32 %v727, 7
        %v729 = vsub.s32 2, %v728
        %v730 = vrot.slane %v257, %v729
        %v731 = vlaneseq
        %v732 = vshrl.u32 %v731, 7
        %v733 = vsub.s32 6, %v732
        %v734 = vrot.slane %v257, %v733
        %v735 = vlaneseq
        %v736 = vshrl.u32 %v735, 7
        %v737 = vsub.s32 2, %v736
        %v738 = vrot.slane %v258, %v737
        %v739 = vlaneseq
        %v740 = vshrl.u32 %v739, 7
        %v741 = vsub.s32 6, %v740
        %v742 = vrot.slane %v258, %v741
        %v751 = vlaneseq
        %v752 = vshrl.u32 %v751, 7
        %v753 = vsub.s32 2, %v752
        %v754 = vrot.slane %v714, %v753
        %v755 = vlaneseq
        %v756 = vshrl.u32 %v755, 7
        %v757 = vsub.s32 2, %v756
        %v758 = vrot.slane %v718, %v757
        %v759 = vlaneseq
        %v760 = vshrl.u32 %v759, 7
        %v761 = vsub.s32 2, %v760
        %v762 = vrot.slane %v722, %v761
        %v763 = vlaneseq
        %v764 = vshrl.u32 %v763, 7
        %v765 = vsub.s32 2, %v764
        %v766 = vrot.slane %v726, %v765
        %v767 = vlaneseq
        %v768 = vshrl.u32 %v767, 7
        %v769 = vsub.s32 2, %v768
        %v770 = vrot.slane %v730, %v769
        %v771 = vlaneseq
        %v772 = vshrl.u32 %v771, 7
        %v773 = vsub.s32 2, %v772
        %v774 = vrot.slane %v734, %v773
        %v775 = vlaneseq
        %v776 = vshrl.u32 %v775, 7
        %v777 = vsub.s32 2, %v776
        %v778 = vrot.slane %v738, %v777
        %v779 = vlaneseq
        %v780 = vshrl.u32 %v779, 7
        %v781 = vsub.s32 2, %v780
        %v782 = vrot.slane %v742, %v781
        %v783 = vmul.f32 %v681, %v754
        %v784 = vmul.f32 %v681, %v758
        %v785 = vmul.f32 %v681, %v762
        %v786 = vmul.f32 %v681, %v766
        %v787 = vmul.f32 %v681, %v770
        %v788 = vmul.f32 %v681, %v774
        %v789 = vmul.f32 %v681, %v778
        %v790 = vmul.f32 %v681, %v782
        %v791 = vmul.f32 %v685, %v754
        %v792 = vmul.f32 %v685, %v758
        %v793 = vmul.f32 %v685, %v762
        %v794 = vmul.f32 %v685, %v766
        %v795 = vmul.f32 %v685, %v770
        %v796 = vmul.f32 %v685, %v774
        %v797 = vmul.f32 %v685, %v778
        %v798 = vmul.f32 %v685, %v782
        %v799 = vmul.f32 %v689, %v754
        %v800 = vmul.f32 %v689, %v758
        %v801 = vmul.f32 %v689, %v762
        %v802 = vmul.f32 %v689, %v766
        %v803 = vmul.f32 %v689, %v770
        %v804 = vmul.f32 %v689, %v774
        %v805 = vmul.f32 %v689, %v778
        %v806 = vmul.f32 %v689, %v782
        %v807 = vmul.f32 %v693, %v754
        %v808 = vmul.f32 %v693, %v758
        %v809 = vmul.f32 %v693, %v762
        %v810 = vmul.f32 %v693, %v766
        %v811 = vmul.f32 %v693, %v770
        %v812 = vmul.f32 %v693, %v774
        %v813 = vmul.f32 %v693, %v778
        %v814 = vmul.f32 %v693, %v782
        %v815 = vmul.f32 %v697, %v754
        %v816 = vmul.f32 %v697, %v758
        %v817 = vmul.f32 %v697, %v762
        %v818 = vmul.f32 %v697, %v766
        %v819 = vmul.f32 %v697, %v770
        %v820 = vmul.f32 %v697, %v774
        %v821 = vmul.f32 %v697, %v778
        %v822 = vmul.f32 %v697, %v782
        %v823 = vmul.f32 %v701, %v754
        %v824 = vmul.f32 %v701, %v758
        %v825 = vmul.f32 %v701, %v762
        %v826 = vmul.f32 %v701, %v766
        %v827 = vmul.f32 %v701, %v770
        %v828 = vmul.f32 %v701, %v774
        %v829 = vmul.f32 %v701, %v778
        %v830 = vmul.f32 %v701, %v782
        %v831 = vmul.f32 %v705, %v754
        %v832 = vmul.f32 %v705, %v758
        %v833 = vmul.f32 %v705, %v762
        %v834 = vmul.f32 %v705, %v766
        %v835 = vmul.f32 %v705, %v770
        %v836 = vmul.f32 %v705, %v774
        %v837 = vmul.f32 %v705, %v778
        %v838 = vmul.f32 %v705, %v782
        %v839 = vmul.f32 %v709, %v754
        %v840 = vmul.f32 %v709, %v758
        %v841 = vmul.f32 %v709, %v762
        %v842 = vmul.f32 %v709, %v766
        %v843 = vmul.f32 %v709, %v770
        %v844 = vmul.f32 %v709, %v774
        %v845 = vmul.f32 %v709, %v778
        %v846 = vmul.f32 %v709, %v782
        %v847 = vadd.f32 %v615, %v783
        %v848 = vadd.f32 %v616, %v784
        %v849 = vadd.f32 %v617, %v785
        %v850 = vadd.f32 %v618, %v786
        %v851 = vadd.f32 %v619, %v787
        %v852 = vadd.f32 %v620, %v788
        %v853 = vadd.f32 %v621, %v789
        %v854 = vadd.f32 %v622, %v790
        %v855 = vadd.f32 %v623, %v791
        %v856 = vadd.f32 %v624, %v792
        %v857 = vadd.f32 %v625, %v793
        %v858 = vadd.f32 %v626, %v794
        %v859 = vadd.f32 %v627, %v795
        %v860 = vadd.f32 %v628, %v796
        %v861 = vadd.f32 %v629, %v797
        %v862 = vadd.f32 %v630, %v798
        %v863 = vadd.f32 %v631, %v799
        %v864 = vadd.f32 %v632, %v800
        %v865 = vadd.f32 %v633, %v801
        %v866 = vadd.f32 %v634, %v802
        %v867 = vadd.f32 %v635, %v803
        %v868 = vadd.f32 %v636, %v804
        %v869 = vadd.f32 %v637, %v805
        %v870 = vadd.f32 %v638, %v806
        %v871 = vadd.f32 %v639, %v807
        %v872 = vadd.f32 %v640, %v808
        %v873 = vadd.f32 %v641, %v809
        %v874 = vadd.f32 %v642, %v810
        %v875 = vadd.f32 %v643, %v811
        %v876 = vadd.f32 %v644, %v812
        %v877 = vadd.f32 %v645, %v813
        %v878 = vadd.f32 %v646, %v814
        %v879 = vadd.f32 %v647, %v815
        %v880 = vadd.f32 %v648, %v816
        %v881 = vadd.f32 %v649, %v817
        %v882 = vadd.f32 %v650, %v818
        %v883 = vadd.f32 %v651, %v819
        %v884 = vadd.f32 %v652, %v820
        %v885 = vadd.f32 %v653, %v821
        %v886 = vadd.f32 %v654, %v822
        %v887 = vadd.f32 %v655, %v823
        %v888 = vadd.f32 %v656, %v824
        %v889 = vadd.f32 %v657, %v825
        %v890 = vadd.f32 %v658, %v826
        %v891 = vadd.f32 %v659, %v827
        %v892 = vadd.f32 %v660, %v828
        %v893 = vadd.f32 %v661, %v829
        %v894 = vadd.f32 %v662, %v830
        %v895 = vadd.f32 %v663, %v831
        %v896 = vadd.f32 %v664, %v832
        %v897 = vadd.f32 %v665, %v833
        %v898 = vadd.f32 %v666, %v834
        %v899 = vadd.f32 %v667, %v835
        %v900 = vadd.f32 %v668, %v836
        %v901 = vadd.f32 %v669, %v837
        %v902 = vadd.f32 %v670, %v838
        %v903 = vadd.f32 %v671, %v839
        %v904 = vadd.f32 %v672, %v840
        %v905 = vadd.f32 %v673, %v841
        %v906 = vadd.f32 %v674, %v842
        %v907 = vadd.f32 %v675, %v843
        %v908 = vadd.f32 %v676, %v844
        %v909 = vadd.f32 %v677, %v845
        %v910 = vadd.f32 %v678, %v846
        %v911 = vld [vmem:[%s2] sm:$0xff]
        %v912 = vld [vmem:[%s2 + $0x8] sm:$0xff]
        %v913 = vld [vmem:[%s2 + $0x10] sm:$0xff]
        %v914 = vld [vmem:[%s2 + $0x18] sm:$0xff]
        %v915 = vld [vmem:[%s2 + $0x20] sm:$0xff]
        %v916 = vld [vmem:[%s2 + $0x28] sm:$0xff]
        %v917 = vld [vmem:[%s2 + $0x30] sm:$0xff]
        %v918 = vld [vmem:[%s2 + $0x38] sm:$0xff]
        %920 = vset.pattern.permute.xlu0 0
        %921 = vperm.xlu0 %920, %v911
        %v922 = vpop.permute.xlu0 %921
        %925 = vset.pattern.permute.xlu0 0
        %926 = vperm.xlu0 %925, %v912
        %v927 = vpop.permute.xlu0 %926
        %930 = vset.pattern.permute.xlu0 0
        %931 = vperm.xlu0 %930, %v913
        %v932 = vpop.permute.xlu0 %931
        %935 = vset.pattern.permute.xlu0 0
        %936 = vperm.xlu0 %935, %v914
        %v937 = vpop.permute.xlu0 %936
        %940 = vset.pattern.permute.xlu0 0
        %941 = vperm.xlu0 %940, %v915
        %v942 = vpop.permute.xlu0 %941
        %945 = vset.pattern.permute.xlu0 0
        %946 = vperm.xlu0 %945, %v916
        %v947 = vpop.permute.xlu0 %946
        %950 = vset.pattern.permute.xlu0 0
        %951 = vperm.xlu0 %950, %v917
        %v952 = vpop.permute.xlu0 %951
        %955 = vset.pattern.permute.xlu0 0
        %956 = vperm.xlu0 %955, %v918
        %v957 = vpop.permute.xlu0 %956
        %v959 = vadd.f32 %v847, %v922
        %v960 = vadd.f32 %v848, %v922
        %v961 = vadd.f32 %v849, %v922
        %v962 = vadd.f32 %v850, %v922
        %v963 = vadd.f32 %v851, %v922
        %v964 = vadd.f32 %v852, %v922
        %v965 = vadd.f32 %v853, %v922
        %v966 = vadd.f32 %v854, %v922
        %v967 = vadd.f32 %v855, %v927
        %v968 = vadd.f32 %v856, %v927
        %v969 = vadd.f32 %v857, %v927
        %v970 = vadd.f32 %v858, %v927
        %v971 = vadd.f32 %v859, %v927
        %v972 = vadd.f32 %v860, %v927
        %v973 = vadd.f32 %v861, %v927
        %v974 = vadd.f32 %v862, %v927
        %v975 = vadd.f32 %v863, %v932
        %v976 = vadd.f32 %v864, %v932
        %v977 = vadd.f32 %v865, %v932
        %v978 = vadd.f32 %v866, %v932
        %v979 = vadd.f32 %v867, %v932
        %v980 = vadd.f32 %v868, %v932
        %v981 = vadd.f32 %v869, %v932
        %v982 = vadd.f32 %v870, %v932
        %v983 = vadd.f32 %v871, %v937
        %v984 = vadd.f32 %v872, %v937
        %v985 = vadd.f32 %v873, %v937
        %v986 = vadd.f32 %v874, %v937
        %v987 = vadd.f32 %v875, %v937
        %v988 = vadd.f32 %v876, %v937
        %v989 = vadd.f32 %v877, %v937
        %v990 = vadd.f32 %v878, %v937
        %v991 = vadd.f32 %v879, %v942
        %v992 = vadd.f32 %v880, %v942
        %v993 = vadd.f32 %v881, %v942
        %v994 = vadd.f32 %v882, %v942
        %v995 = vadd.f32 %v883, %v942
        %v996 = vadd.f32 %v884, %v942
        %v997 = vadd.f32 %v885, %v942
        %v998 = vadd.f32 %v886, %v942
        %v999 = vadd.f32 %v887, %v947
        %v1000 = vadd.f32 %v888, %v947
        %v1001 = vadd.f32 %v889, %v947
        %v1002 = vadd.f32 %v890, %v947
        %v1003 = vadd.f32 %v891, %v947
        %v1004 = vadd.f32 %v892, %v947
        %v1005 = vadd.f32 %v893, %v947
        %v1006 = vadd.f32 %v894, %v947
        %v1007 = vadd.f32 %v895, %v952
        %v1008 = vadd.f32 %v896, %v952
        %v1009 = vadd.f32 %v897, %v952
        %v1010 = vadd.f32 %v898, %v952
        %v1011 = vadd.f32 %v899, %v952
        %v1012 = vadd.f32 %v900, %v952
        %v1013 = vadd.f32 %v901, %v952
        %v1014 = vadd.f32 %v902, %v952
        %v1015 = vadd.f32 %v903, %v957
        %v1016 = vadd.f32 %v904, %v957
        %v1017 = vadd.f32 %v905, %v957
        %v1018 = vadd.f32 %v906, %v957
        %v1019 = vadd.f32 %v907, %v957
        %v1020 = vadd.f32 %v908, %v957
        %v1021 = vadd.f32 %v909, %v957
        %v1022 = vadd.f32 %v910, %v957
        %v1023 = vmax.f32 %v959, 0.0
        %v1024 = vmax.f32 %v960, 0.0
        %v1025 = vmax.f32 %v961, 0.0
        %v1026 = vmax.f32 %v962, 0.0
        %v1027 = vmax.f32 %v963, 0.0
        %v1028 = vmax.f32 %v964, 0.0
        %v1029 = vmax.f32 %v965, 0.0
        %v1030 = vmax.f32 %v966, 0.0
        %v1031 = vmax.f32 %v967, 0.0
        %v1032 = vmax.f32 %v968, 0.0
        %v1033 = vmax.f32 %v969, 0.0
        %v1034 = vmax.f32 %v970, 0.0
        %v1035 = vmax.f32 %v971, 0.0
        %v1036 = vmax.f32 %v972, 0.0
        %v1037 = vmax.f32 %v973, 0.0
        %v1038 = vmax.f32 %v974, 0.0
        %v1039 = vmax.f32 %v975, 0.0
        %v1040 = vmax.f32 %v976, 0.0
        %v1041 = vmax.f32 %v977, 0.0
        %v1042 = vmax.f32 %v978, 0.0
        %v1043 = vmax.f32 %v979, 0.0
        %v1044 = vmax.f32 %v980, 0.0
        %v1045 = vmax.f32 %v981, 0.0
        %v1046 = vmax.f32 %v982, 0.0
        %v1047 = vmax.f32 %v983, 0.0
        %v1048 = vmax.f32 %v984, 0.0
        %v1049 = vmax.f32 %v985, 0.0
        %v1050 = vmax.f32 %v986, 0.0
        %v1051 = vmax.f32 %v987, 0.0
        %v1052 = vmax.f32 %v988, 0.0
        %v1053 = vmax.f32 %v989, 0.0
        %v1054 = vmax.f32 %v990, 0.0
        %v1055 = vmax.f32 %v991, 0.0
        %v1056 = vmax.f32 %v992, 0.0
        %v1057 = vmax.f32 %v993, 0.0
        %v1058 = vmax.f32 %v994, 0.0
        %v1059 = vmax.f32 %v995, 0.0
        %v1060 = vmax.f32 %v996, 0.0
        %v1061 = vmax.f32 %v997, 0.0
        %v1062 = vmax.f32 %v998, 0.0
        %v1063 = vmax.f32 %v999, 0.0
        %v1064 = vmax.f32 %v1000, 0.0
        %v1065 = vmax.f32 %v1001, 0.0
        %v1066 = vmax.f32 %v1002, 0.0
        %v1067 = vmax.f32 %v1003, 0.0
        %v1068 = vmax.f32 %v1004, 0.0
        %v1069 = vmax.f32 %v1005, 0.0
        %v1070 = vmax.f32 %v1006, 0.0
        %v1071 = vmax.f32 %v1007, 0.0
        %v1072 = vmax.f32 %v1008, 0.0
        %v1073 = vmax.f32 %v1009, 0.0
        %v1074 = vmax.f32 %v1010, 0.0
        %v1075 = vmax.f32 %v1011, 0.0
        %v1076 = vmax.f32 %v1012, 0.0
        %v1077 = vmax.f32 %v1013, 0.0
        %v1078 = vmax.f32 %v1014, 0.0
        %v1079 = vmax.f32 %v1015, 0.0
        %v1080 = vmax.f32 %v1016, 0.0
        %v1081 = vmax.f32 %v1017, 0.0
        %v1082 = vmax.f32 %v1018, 0.0
        %v1083 = vmax.f32 %v1019, 0.0
        %v1084 = vmax.f32 %v1020, 0.0
        %v1085 = vmax.f32 %v1021, 0.0
        %v1086 = vmax.f32 %v1022, 0.0
        %v1087 = vld [vmem:[%s3] sm:$0xf]
        %v1088 = vld [vmem:[%s3 + $0x4] sm:$0xf]
        %v1089 = vld [vmem:[%s3 + $0x8] sm:$0xf]
        %v1090 = vld [vmem:[%s3 + $0xc] sm:$0xf]
        %v1091 = vld [vmem:[%s3 + $0x10] sm:$0xf]
        %v1092 = vld [vmem:[%s3 + $0x14] sm:$0xf]
        %v1093 = vld [vmem:[%s3 + $0x18] sm:$0xf]
        %v1094 = vld [vmem:[%s3 + $0x1c] sm:$0xf]
        %v1095 = vpack.c.bf16 %v1031, %v1023
        %v1096 = vpack.c.bf16 %v1032, %v1024
        %v1097 = vpack.c.bf16 %v1033, %v1025
        %v1098 = vpack.c.bf16 %v1034, %v1026
        %v1099 = vpack.c.bf16 %v1035, %v1027
        %v1100 = vpack.c.bf16 %v1036, %v1028
        %v1101 = vpack.c.bf16 %v1037, %v1029
        %v1102 = vpack.c.bf16 %v1038, %v1030
        %v1103 = vpack.c.bf16 %v1047, %v1039
        %v1104 = vpack.c.bf16 %v1048, %v1040
        %v1105 = vpack.c.bf16 %v1049, %v1041
        %v1106 = vpack.c.bf16 %v1050, %v1042
        %v1107 = vpack.c.bf16 %v1051, %v1043
        %v1108 = vpack.c.bf16 %v1052, %v1044
        %v1109 = vpack.c.bf16 %v1053, %v1045
        %v1110 = vpack.c.bf16 %v1054, %v1046
        %v1111 = vpack.c.bf16 %v1063, %v1055
        %v1112 = vpack.c.bf16 %v1064, %v1056
        %v1113 = vpack.c.bf16 %v1065, %v1057
        %v1114 = vpack.c.bf16 %v1066, %v1058
        %v1115 = vpack.c.bf16 %v1067, %v1059
        %v1116 = vpack.c.bf16 %v1068, %v1060
        %v1117 = vpack.c.bf16 %v1069, %v1061
        %v1118 = vpack.c.bf16 %v1070, %v1062
        %v1119 = vpack.c.bf16 %v1079, %v1071
        %v1120 = vpack.c.bf16 %v1080, %v1072
        %v1121 = vpack.c.bf16 %v1081, %v1073
        %v1122 = vpack.c.bf16 %v1082, %v1074
        %v1123 = vpack.c.bf16 %v1083, %v1075
        %v1124 = vpack.c.bf16 %v1084, %v1076
        %v1125 = vpack.c.bf16 %v1085, %v1077
        %v1126 = vpack.c.bf16 %v1086, %v1078
        %v1127 = vld [vmem:[%s4] sm:$0xff]
        %v1128 = vld [vmem:[%s4 + $0x8] sm:$0xff]
        %v1129 = vld [vmem:[%s4 + $0x10] sm:$0xff]
        %v1130 = vld [vmem:[%s4 + $0x18] sm:$0xff]
        %v1131 = vld [vmem:[%s4 + $0x20] sm:$0xff]
        %v1132 = vld [vmem:[%s4 + $0x28] sm:$0xff]
        %v1133 = vld [vmem:[%s4 + $0x30] sm:$0xff]
        %v1134 = vld [vmem:[%s4 + $0x38] sm:$0xff]
        %1136 = vset.pattern.permute.xlu0 0
        %1137 = vperm.xlu0 %1136, %v1127
        %v1138 = vpop.permute.xlu0 %1137
        %1141 = vset.pattern.permute.xlu0 0
        %1142 = vperm.xlu0 %1141, %v1128
        %v1143 = vpop.permute.xlu0 %1142
        %1146 = vset.pattern.permute.xlu0 0
        %1147 = vperm.xlu0 %1146, %v1129
        %v1148 = vpop.permute.xlu0 %1147
        %1151 = vset.pattern.permute.xlu0 0
        %1152 = vperm.xlu0 %1151, %v1130
        %v1153 = vpop.permute.xlu0 %1152
        %1156 = vset.pattern.permute.xlu0 0
        %1157 = vperm.xlu0 %1156, %v1131
        %v1158 = vpop.permute.xlu0 %1157
        %1161 = vset.pattern.permute.xlu0 0
        %1162 = vperm.xlu0 %1161, %v1132
        %v1163 = vpop.permute.xlu0 %1162
        %1166 = vset.pattern.permute.xlu0 0
        %1167 = vperm.xlu0 %1166, %v1133
        %v1168 = vpop.permute.xlu0 %1167
        %1171 = vset.pattern.permute.xlu0 0
        %1172 = vperm.xlu0 %1171, %v1134
        %v1173 = vpop.permute.xlu0 %1172
        %v1183 = vunpack.c.l.b16 %v1087
        %v1184 = vunpack.c.l.b16 %v1088
        %v1185 = vunpack.c.l.b16 %v1089
        %v1186 = vunpack.c.l.b16 %v1090
        %v1187 = vunpack.c.l.b16 %v1091
        %v1188 = vunpack.c.l.b16 %v1092
        %v1189 = vunpack.c.l.b16 %v1093
        %v1190 = vunpack.c.l.b16 %v1094
        %v1191 = vpack.c.b16 %v1184, %v1183
        %v1192 = vpack.c.b16 %v1186, %v1185
        %v1193 = vpack.c.b16 %v1188, %v1187
        %v1194 = vpack.c.b16 %v1190, %v1189
        %vm1195 = vcmask 523264
        %v1197 = vsel %vm1195, %v1191, 0
        %v1200 = vsel %vm1195, %v1192, 0
        %v1203 = vsel %vm1195, %v1193, 0
        %v1206 = vsel %vm1195, %v1194, 0
        %1208 = vmatprep.subr.bf16.mxu0 %v1096
        %1209 = vmatpush1.bf16.msra.mxu0 %v1095
        %1210 = vmatprep.subr.bf16.mxu0 %v1104
        %1211 = vmatpush1.bf16.msra.mxu0 %v1103
        %1212 = vmatprep.subr.bf16.mxu0 %v1112
        %1213 = vmatpush1.bf16.msra.mxu0 %v1111
        %1214 = vmatprep.subr.bf16.mxu0 %v1120
        %1215 = vmatpush1.bf16.msra.mxu0 %v1119
        %1216 = vmatprep.subr.bf16.mxu0 0
        %1217 = vmatpush1.bf16.msra.mxu0 0
        %1218 = vmatprep.subr.bf16.mxu0 0
        %1219 = vmatpush1.bf16.msra.mxu0 0
        %1220 = vmatprep.subr.bf16.mxu0 0
        %1221 = vmatpush1.bf16.msra.mxu0 0
        %1222 = vmatprep.subr.bf16.mxu0 0
        %1223 = vmatpush1.bf16.msra.mxu0 0
        %1224 = vmatprep.subr.bf16.mxu0 0
        %1225 = vmatpush1.bf16.msra.mxu0 0
        %1226 = vmatprep.subr.bf16.mxu0 0
        %1227 = vmatpush1.bf16.msra.mxu0 0
        %1228 = vmatprep.subr.bf16.mxu0 0
        %1229 = vmatpush1.bf16.msra.mxu0 0
        %1230 = vmatprep.subr.bf16.mxu0 0
        %1231 = vmatpush1.bf16.msra.mxu0 0
        %1232 = vmatprep.subr.bf16.mxu0 0
        %1233 = vmatpush1.bf16.msra.mxu0 0
        %1234 = vmatprep.subr.bf16.mxu0 0
        %1235 = vmatpush1.bf16.msra.mxu0 0
        %1236 = vmatprep.subr.bf16.mxu0 0
        %1237 = vmatpush1.bf16.msra.mxu0 0
        %1238 = vmatprep.subr.bf16.mxu0 0
        %1239 = vmatpush1.bf16.msra.mxu0 0
        %1240 = vmatprep.mubr.bf16.mxu0 0
        %1241 = vmatmul.mubr.bf16.gmra.mrb[0].mxu0 %v1197
        %v1242 = vpop.f32.mrb[0].mxu0
        %v1243 = vadd.f32 %v1138, %v1242
        %v1244 = vpop.f32.mrb[0].mxu0
        %v1245 = vadd.f32 %v1138, %v1244
        %v1246 = vpop.f32.mrb[0].mxu0
        %v1247 = vadd.f32 %v1143, %v1246
        %v1248 = vpop.f32.mrb[0].mxu0
        %v1249 = vadd.f32 %v1143, %v1248
        %1250 = vmatprep.mubr.bf16.mxu0 0
        %1251 = vmatmul.mubr.bf16.gmra.mrb[0].mxu0 %v1200
        %v1252 = vpop.f32.mrb[0].mxu0
        %v1253 = vadd.f32 %v1148, %v1252
        %v1254 = vpop.f32.mrb[0].mxu0
        %v1255 = vadd.f32 %v1148, %v1254
        %v1256 = vpop.f32.mrb[0].mxu0
        %v1257 = vadd.f32 %v1153, %v1256
        %v1258 = vpop.f32.mrb[0].mxu0
        %v1259 = vadd.f32 %v1153, %v1258
        %1260 = vmatprep.mubr.bf16.mxu0 0
        %1261 = vmatmul.mubr.bf16.gmra.mrb[0].mxu0 %v1203
        %v1262 = vpop.f32.mrb[0].mxu0
        %v1263 = vadd.f32 %v1158, %v1262
        %v1264 = vpop.f32.mrb[0].mxu0
        %v1265 = vadd.f32 %v1158, %v1264
        %v1266 = vpop.f32.mrb[0].mxu0
        %v1267 = vadd.f32 %v1163, %v1266
        %v1268 = vpop.f32.mrb[0].mxu0
        %v1269 = vadd.f32 %v1163, %v1268
        %1270 = vmatprep.mubr.bf16.mxu0 0
        %1271 = vmatmul.mubr.bf16.gmra.mrb[0].mxu0 %v1206
        %v1272 = vpop.f32.mrb[0].mxu0
        %v1273 = vadd.f32 %v1168, %v1272
        %v1274 = vpop.f32.mrb[0].mxu0
        %v1275 = vadd.f32 %v1168, %v1274
        %v1276 = vpop.f32.mrb[0].mxu0
        %v1277 = vadd.f32 %v1173, %v1276
        %v1278 = vpop.f32.mrb[0].mxu0
        %v1279 = vadd.f32 %v1173, %v1278
        %1280 = vdwg.mxu0
        %1281 = vmatprep.subr.bf16.mxu0 %v1098
        %1282 = vmatpush1.bf16.msra.mxu0 %v1097
        %1283 = vmatprep.subr.bf16.mxu0 %v1106
        %1284 = vmatpush1.bf16.msra.mxu0 %v1105
        %1285 = vmatprep.subr.bf16.mxu0 %v1114
        %1286 = vmatpush1.bf16.msra.mxu0 %v1113
        %1287 = vmatprep.subr.bf16.mxu0 %v1122
        %1288 = vmatpush1.bf16.msra.mxu0 %v1121
        %1289 = vmatprep.subr.bf16.mxu0 0
        %1290 = vmatpush1.bf16.msra.mxu0 0
        %1291 = vmatprep.subr.bf16.mxu0 0
        %1292 = vmatpush1.bf16.msra.mxu0 0
        %1293 = vmatprep.subr.bf16.mxu0 0
        %1294 = vmatpush1.bf16.msra.mxu0 0
        %1295 = vmatprep.subr.bf16.mxu0 0
        %1296 = vmatpush1.bf16.msra.mxu0 0
        %1297 = vmatprep.subr.bf16.mxu0 0
        %1298 = vmatpush1.bf16.msra.mxu0 0
        %1299 = vmatprep.subr.bf16.mxu0 0
        %1300 = vmatpush1.bf16.msra.mxu0 0
        %1301 = vmatprep.subr.bf16.mxu0 0
        %1302 = vmatpush1.bf16.msra.mxu0 0
        %1303 = vmatprep.subr.bf16.mxu0 0
        %1304 = vmatpush1.bf16.msra.mxu0 0
        %1305 = vmatprep.subr.bf16.mxu0 0
        %1306 = vmatpush1.bf16.msra.mxu0 0
        %1307 = vmatprep.subr.bf16.mxu0 0
        %1308 = vmatpush1.bf16.msra.mxu0 0
        %1309 = vmatprep.subr.bf16.mxu0 0
        %1310 = vmatpush1.bf16.msra.mxu0 0
        %1311 = vmatprep.subr.bf16.mxu0 0
        %1312 = vmatpush1.bf16.msra.mxu0 0
        %1313 = vmatprep.mubr.bf16.mxu0 0
        %1314 = vmatmul.mubr.bf16.gmra.mrb[0].mxu0 %v1197
        %v1315 = vpop.f32.mrb[0].mxu0
        %v1316 = vadd.f32 %v1138, %v1315
        %v1317 = vpop.f32.mrb[0].mxu0
        %v1318 = vadd.f32 %v1138, %v1317
        %v1319 = vpop.f32.mrb[0].mxu0
        %v1320 = vadd.f32 %v1143, %v1319
        %v1321 = vpop.f32.mrb[0].mxu0
        %v1322 = vadd.f32 %v1143, %v1321
        %1323 = vmatprep.mubr.bf16.mxu0 0
        %1324 = vmatmul.mubr.bf16.gmra.mrb[0].mxu0 %v1200
        %v1325 = vpop.f32.mrb[0].mxu0
        %v1326 = vadd.f32 %v1148, %v1325
        %v1327 = vpop.f32.mrb[0].mxu0
        %v1328 = vadd.f32 %v1148, %v1327
        %v1329 = vpop.f32.mrb[0].mxu0
        %v1330 = vadd.f32 %v1153, %v1329
        %v1331 = vpop.f32.mrb[0].mxu0
        %v1332 = vadd.f32 %v1153, %v1331
        %1333 = vmatprep.mubr.bf16.mxu0 0
        %1334 = vmatmul.mubr.bf16.gmra.mrb[0].mxu0 %v1203
        %v1335 = vpop.f32.mrb[0].mxu0
        %v1336 = vadd.f32 %v1158, %v1335
        %v1337 = vpop.f32.mrb[0].mxu0
        %v1338 = vadd.f32 %v1158, %v1337
        %v1339 = vpop.f32.mrb[0].mxu0
        %v1340 = vadd.f32 %v1163, %v1339
        %v1341 = vpop.f32.mrb[0].mxu0
        %v1342 = vadd.f32 %v1163, %v1341
        %1343 = vmatprep.mubr.bf16.mxu0 0
        %1344 = vmatmul.mubr.bf16.gmra.mrb[0].mxu0 %v1206
        %v1345 = vpop.f32.mrb[0].mxu0
        %v1346 = vadd.f32 %v1168, %v1345
        %v1347 = vpop.f32.mrb[0].mxu0
        %v1348 = vadd.f32 %v1168, %v1347
        %v1349 = vpop.f32.mrb[0].mxu0
        %v1350 = vadd.f32 %v1173, %v1349
        %v1351 = vpop.f32.mrb[0].mxu0
        %v1352 = vadd.f32 %v1173, %v1351
        %1353 = vdwg.mxu0
        %1354 = vmatprep.subr.bf16.mxu0 %v1100
        %1355 = vmatpush1.bf16.msra.mxu0 %v1099
        %1356 = vmatprep.subr.bf16.mxu0 %v1108
        %1357 = vmatpush1.bf16.msra.mxu0 %v1107
        %1358 = vmatprep.subr.bf16.mxu0 %v1116
        %1359 = vmatpush1.bf16.msra.mxu0 %v1115
        %1360 = vmatprep.subr.bf16.mxu0 %v1124
        %1361 = vmatpush1.bf16.msra.mxu0 %v1123
        %1362 = vmatprep.subr.bf16.mxu0 0
        %1363 = vmatpush1.bf16.msra.mxu0 0
        %1364 = vmatprep.subr.bf16.mxu0 0
        %1365 = vmatpush1.bf16.msra.mxu0 0
        %1366 = vmatprep.subr.bf16.mxu0 0
        %1367 = vmatpush1.bf16.msra.mxu0 0
        %1368 = vmatprep.subr.bf16.mxu0 0
        %1369 = vmatpush1.bf16.msra.mxu0 0
        %1370 = vmatprep.subr.bf16.mxu0 0
        %1371 = vmatpush1.bf16.msra.mxu0 0
        %1372 = vmatprep.subr.bf16.mxu0 0
        %1373 = vmatpush1.bf16.msra.mxu0 0
        %1374 = vmatprep.subr.bf16.mxu0 0
        %1375 = vmatpush1.bf16.msra.mxu0 0
        %1376 = vmatprep.subr.bf16.mxu0 0
        %1377 = vmatpush1.bf16.msra.mxu0 0
        %1378 = vmatprep.subr.bf16.mxu0 0
        %1379 = vmatpush1.bf16.msra.mxu0 0
        %1380 = vmatprep.subr.bf16.mxu0 0
        %1381 = vmatpush1.bf16.msra.mxu0 0
        %1382 = vmatprep.subr.bf16.mxu0 0
        %1383 = vmatpush1.bf16.msra.mxu0 0
        %1384 = vmatprep.subr.bf16.mxu0 0
        %1385 = vmatpush1.bf16.msra.mxu0 0
        %1386 = vmatprep.mubr.bf16.mxu0 0
        %1387 = vmatmul.mubr.bf16.gmra.mrb[0].mxu0 %v1197
        %v1388 = vpop.f32.mrb[0].mxu0
        %v1389 = vadd.f32 %v1138, %v1388
        %v1390 = vpop.f32.mrb[0].mxu0
        %v1391 = vadd.f32 %v1138, %v1390
        %v1392 = vpop.f32.mrb[0].mxu0
        %v1393 = vadd.f32 %v1143, %v1392
        %v1394 = vpop.f32.mrb[0].mxu0
        %v1395 = vadd.f32 %v1143, %v1394
        %1396 = vmatprep.mubr.bf16.mxu0 0
        %1397 = vmatmul.mubr.bf16.gmra.mrb[0].mxu0 %v1200
        %v1398 = vpop.f32.mrb[0].mxu0
        %v1399 = vadd.f32 %v1148, %v1398
        %v1400 = vpop.f32.mrb[0].mxu0
        %v1401 = vadd.f32 %v1148, %v1400
        %v1402 = vpop.f32.mrb[0].mxu0
        %v1403 = vadd.f32 %v1153, %v1402
        %v1404 = vpop.f32.mrb[0].mxu0
        %v1405 = vadd.f32 %v1153, %v1404
        %1406 = vmatprep.mubr.bf16.mxu0 0
        %1407 = vmatmul.mubr.bf16.gmra.mrb[0].mxu0 %v1203
        %v1408 = vpop.f32.mrb[0].mxu0
        %v1409 = vadd.f32 %v1158, %v1408
        %v1410 = vpop.f32.mrb[0].mxu0
        %v1411 = vadd.f32 %v1158, %v1410
        %v1412 = vpop.f32.mrb[0].mxu0
        %v1413 = vadd.f32 %v1163, %v1412
        %v1414 = vpop.f32.mrb[0].mxu0
        %v1415 = vadd.f32 %v1163, %v1414
        %1416 = vmatprep.mubr.bf16.mxu0 0
        %1417 = vmatmul.mubr.bf16.gmra.mrb[0].mxu0 %v1206
        %v1418 = vpop.f32.mrb[0].mxu0
        %v1419 = vadd.f32 %v1168, %v1418
        %v1420 = vpop.f32.mrb[0].mxu0
        %v1421 = vadd.f32 %v1168, %v1420
        %v1422 = vpop.f32.mrb[0].mxu0
        %v1423 = vadd.f32 %v1173, %v1422
        %v1424 = vpop.f32.mrb[0].mxu0
        %v1425 = vadd.f32 %v1173, %v1424
        %1426 = vdwg.mxu0
        %1427 = vmatprep.subr.bf16.mxu0 %v1102
        %1428 = vmatpush1.bf16.msra.mxu0 %v1101
        %1429 = vmatprep.subr.bf16.mxu0 %v1110
        %1430 = vmatpush1.bf16.msra.mxu0 %v1109
        %1431 = vmatprep.subr.bf16.mxu0 %v1118
        %1432 = vmatpush1.bf16.msra.mxu0 %v1117
        %1433 = vmatprep.subr.bf16.mxu0 %v1126
        %1434 = vmatpush1.bf16.msra.mxu0 %v1125
        %1435 = vmatprep.subr.bf16.mxu0 0
        %1436 = vmatpush1.bf16.msra.mxu0 0
        %1437 = vmatprep.subr.bf16.mxu0 0
        %1438 = vmatpush1.bf16.msra.mxu0 0
        %1439 = vmatprep.subr.bf16.mxu0 0
        %1440 = vmatpush1.bf16.msra.mxu0 0
        %1441 = vmatprep.subr.bf16.mxu0 0
        %1442 = vmatpush1.bf16.msra.mxu0 0
        %1443 = vmatprep.subr.bf16.mxu0 0
        %1444 = vmatpush1.bf16.msra.mxu0 0
        %1445 = vmatprep.subr.bf16.mxu0 0
        %1446 = vmatpush1.bf16.msra.mxu0 0
        %1447 = vmatprep.subr.bf16.mxu0 0
        %1448 = vmatpush1.bf16.msra.mxu0 0
        %1449 = vmatprep.subr.bf16.mxu0 0
        %1450 = vmatpush1.bf16.msra.mxu0 0
        %1451 = vmatprep.subr.bf16.mxu0 0
        %1452 = vmatpush1.bf16.msra.mxu0 0
        %1453 = vmatprep.subr.bf16.mxu0 0
        %1454 = vmatpush1.bf16.msra.mxu0 0
        %1455 = vmatprep.subr.bf16.mxu0 0
        %1456 = vmatpush1.bf16.msra.mxu0 0
        %1457 = vmatprep.subr.bf16.mxu0 0
        %1458 = vmatpush1.bf16.msra.mxu0 0
        %1459 = vmatprep.mubr.bf16.mxu0 0
        %1460 = vmatmul.mubr.bf16.gmra.mrb[0].mxu0 %v1197
        %v1461 = vpop.f32.mrb[0].mxu0
        %v1462 = vadd.f32 %v1138, %v1461
        %v1463 = vpop.f32.mrb[0].mxu0
        %v1464 = vadd.f32 %v1138, %v1463
        %v1465 = vpop.f32.mrb[0].mxu0
        %v1466 = vadd.f32 %v1143, %v1465
        %v1467 = vpop.f32.mrb[0].mxu0
        %v1468 = vadd.f32 %v1143, %v1467
        %1469 = vmatprep.mubr.bf16.mxu0 0
        %1470 = vmatmul.mubr.bf16.gmra.mrb[0].mxu0 %v1200
        %v1471 = vpop.f32.mrb[0].mxu0
        %v1472 = vadd.f32 %v1148, %v1471
        %v1473 = vpop.f32.mrb[0].mxu0
        %v1474 = vadd.f32 %v1148, %v1473
        %v1475 = vpop.f32.mrb[0].mxu0
        %v1476 = vadd.f32 %v1153, %v1475
        %v1477 = vpop.f32.mrb[0].mxu0
        %v1478 = vadd.f32 %v1153, %v1477
        %1479 = vmatprep.mubr.bf16.mxu0 0
        %1480 = vmatmul.mubr.bf16.gmra.mrb[0].mxu0 %v1203
        %v1481 = vpop.f32.mrb[0].mxu0
        %v1482 = vadd.f32 %v1158, %v1481
        %v1483 = vpop.f32.mrb[0].mxu0
        %v1484 = vadd.f32 %v1158, %v1483
        %v1485 = vpop.f32.mrb[0].mxu0
        %v1486 = vadd.f32 %v1163, %v1485
        %v1487 = vpop.f32.mrb[0].mxu0
        %v1488 = vadd.f32 %v1163, %v1487
        %1489 = vmatprep.mubr.bf16.mxu0 0
        %1490 = vmatmul.mubr.bf16.gmra.mrb[0].mxu0 %v1206
        %v1491 = vpop.f32.mrb[0].mxu0
        %v1492 = vadd.f32 %v1168, %v1491
        %v1493 = vpop.f32.mrb[0].mxu0
        %v1494 = vadd.f32 %v1168, %v1493
        %v1495 = vpop.f32.mrb[0].mxu0
        %v1496 = vadd.f32 %v1173, %v1495
        %v1497 = vpop.f32.mrb[0].mxu0
        %v1498 = vadd.f32 %v1173, %v1497
        %1499 = vdwg.mxu0
        %v1500 = vmax.f32 %v1243, 0.0
        %v1501 = vmax.f32 %v1245, 0.0
        %v1502 = vmax.f32 %v1316, 0.0
        %v1503 = vmax.f32 %v1318, 0.0
        %v1504 = vmax.f32 %v1389, 0.0
        %v1505 = vmax.f32 %v1391, 0.0
        %v1506 = vmax.f32 %v1462, 0.0
        %v1507 = vmax.f32 %v1464, 0.0
        %v1508 = vmax.f32 %v1247, 0.0
        %v1509 = vmax.f32 %v1249, 0.0
        %v1510 = vmax.f32 %v1320, 0.0
        %v1511 = vmax.f32 %v1322, 0.0
        %v1512 = vmax.f32 %v1393, 0.0
        %v1513 = vmax.f32 %v1395, 0.0
        %v1514 = vmax.f32 %v1466, 0.0
        %v1515 = vmax.f32 %v1468, 0.0
        %v1516 = vmax.f32 %v1253, 0.0
        %v1517 = vmax.f32 %v1255, 0.0
        %v1518 = vmax.f32 %v1326, 0.0
        %v1519 = vmax.f32 %v1328, 0.0
        %v1520 = vmax.f32 %v1399, 0.0
        %v1521 = vmax.f32 %v1401, 0.0
        %v1522 = vmax.f32 %v1472, 0.0
        %v1523 = vmax.f32 %v1474, 0.0
        %v1524 = vmax.f32 %v1257, 0.0
        %v1525 = vmax.f32 %v1259, 0.0
        %v1526 = vmax.f32 %v1330, 0.0
        %v1527 = vmax.f32 %v1332, 0.0
        %v1528 = vmax.f32 %v1403, 0.0
        %v1529 = vmax.f32 %v1405, 0.0
        %v1530 = vmax.f32 %v1476, 0.0
        %v1531 = vmax.f32 %v1478, 0.0
        %v1532 = vmax.f32 %v1263, 0.0
        %v1533 = vmax.f32 %v1265, 0.0
        %v1534 = vmax.f32 %v1336, 0.0
        %v1535 = vmax.f32 %v1338, 0.0
        %v1536 = vmax.f32 %v1409, 0.0
        %v1537 = vmax.f32 %v1411, 0.0
        %v1538 = vmax.f32 %v1482, 0.0
        %v1539 = vmax.f32 %v1484, 0.0
        %v1540 = vmax.f32 %v1267, 0.0
        %v1541 = vmax.f32 %v1269, 0.0
        %v1542 = vmax.f32 %v1340, 0.0
        %v1543 = vmax.f32 %v1342, 0.0
        %v1544 = vmax.f32 %v1413, 0.0
        %v1545 = vmax.f32 %v1415, 0.0
        %v1546 = vmax.f32 %v1486, 0.0
        %v1547 = vmax.f32 %v1488, 0.0
        %v1548 = vmax.f32 %v1273, 0.0
        %v1549 = vmax.f32 %v1275, 0.0
        %v1550 = vmax.f32 %v1346, 0.0
        %v1551 = vmax.f32 %v1348, 0.0
        %v1552 = vmax.f32 %v1419, 0.0
        %v1553 = vmax.f32 %v1421, 0.0
        %v1554 = vmax.f32 %v1492, 0.0
        %v1555 = vmax.f32 %v1494, 0.0
        %v1556 = vmax.f32 %v1277, 0.0
        %v1557 = vmax.f32 %v1279, 0.0
        %v1558 = vmax.f32 %v1350, 0.0
        %v1559 = vmax.f32 %v1352, 0.0
        %v1560 = vmax.f32 %v1423, 0.0
        %v1561 = vmax.f32 %v1425, 0.0
        %v1562 = vmax.f32 %v1496, 0.0
        %v1563 = vmax.f32 %v1498, 0.0
        %1564 = vst [vmem:[%s242] sm:$0xff] %v1500
        %1565 = vst [vmem:[%s242 + $0x8] sm:$0xff] %v1501
        %1566 = vst [vmem:[%s242 + $0x10] sm:$0xff] %v1502
        %1567 = vst [vmem:[%s242 + $0x18] sm:$0xff] %v1503
        %1568 = vst [vmem:[%s242 + $0x20] sm:$0xff] %v1504
        %1569 = vst [vmem:[%s242 + $0x28] sm:$0xff] %v1505
        %1570 = vst [vmem:[%s242 + $0x30] sm:$0xff] %v1506
        %1571 = vst [vmem:[%s242 + $0x38] sm:$0xff] %v1507
        %1572 = vst [vmem:[%s242 + $0x40] sm:$0xff] %v1508
        %1573 = vst [vmem:[%s242 + $0x48] sm:$0xff] %v1509
        %1574 = vst [vmem:[%s242 + $0x50] sm:$0xff] %v1510
        %1575 = vst [vmem:[%s242 + $0x58] sm:$0xff] %v1511
        %1576 = vst [vmem:[%s242 + $0x60] sm:$0xff] %v1512
        %1577 = vst [vmem:[%s242 + $0x68] sm:$0xff] %v1513
        %1578 = vst [vmem:[%s242 + $0x70] sm:$0xff] %v1514
        %1579 = vst [vmem:[%s242 + $0x78] sm:$0xff] %v1515
        %1580 = vst [vmem:[%s242 + $0x80] sm:$0xff] %v1516
        %1581 = vst [vmem:[%s242 + $0x88] sm:$0xff] %v1517
        %1582 = vst [vmem:[%s242 + $0x90] sm:$0xff] %v1518
        %1583 = vst [vmem:[%s242 + $0x98] sm:$0xff] %v1519
        %1584 = vst [vmem:[%s242 + $0xa0] sm:$0xff] %v1520
        %1585 = vst [vmem:[%s242 + $0xa8] sm:$0xff] %v1521
        %1586 = vst [vmem:[%s242 + $0xb0] sm:$0xff] %v1522
        %1587 = vst [vmem:[%s242 + $0xb8] sm:$0xff] %v1523
        %1588 = vst [vmem:[%s242 + $0xc0] sm:$0xff] %v1524
        %1589 = vst [vmem:[%s242 + $0xc8] sm:$0xff] %v1525
        %1590 = vst [vmem:[%s242 + $0xd0] sm:$0xff] %v1526
        %1591 = vst [vmem:[%s242 + $0xd8] sm:$0xff] %v1527
        %1592 = vst [vmem:[%s242 + $0xe0] sm:$0xff] %v1528
        %1593 = vst [vmem:[%s242 + $0xe8] sm:$0xff] %v1529
        %1594 = vst [vmem:[%s242 + $0xf0] sm:$0xff] %v1530
        %1595 = vst [vmem:[%s242 + $0xf8] sm:$0xff] %v1531
        %1596 = vst [vmem:[%s242 + $0x100] sm:$0xff] %v1532
        %1597 = vst [vmem:[%s242 + $0x108] sm:$0xff] %v1533
        %1598 = vst [vmem:[%s242 + $0x110] sm:$0xff] %v1534
        %1599 = vst [vmem:[%s242 + $0x118] sm:$0xff] %v1535
        %1600 = vst [vmem:[%s242 + $0x120] sm:$0xff] %v1536
        %1601 = vst [vmem:[%s242 + $0x128] sm:$0xff] %v1537
        %1602 = vst [vmem:[%s242 + $0x130] sm:$0xff] %v1538
        %1603 = vst [vmem:[%s242 + $0x138] sm:$0xff] %v1539
        %1604 = vst [vmem:[%s242 + $0x140] sm:$0xff] %v1540
        %1605 = vst [vmem:[%s242 + $0x148] sm:$0xff] %v1541
        %1606 = vst [vmem:[%s242 + $0x150] sm:$0xff] %v1542
        %1607 = vst [vmem:[%s242 + $0x158] sm:$0xff] %v1543
        %1608 = vst [vmem:[%s242 + $0x160] sm:$0xff] %v1544
        %1609 = vst [vmem:[%s242 + $0x168] sm:$0xff] %v1545
        %1610 = vst [vmem:[%s242 + $0x170] sm:$0xff] %v1546
        %1611 = vst [vmem:[%s242 + $0x178] sm:$0xff] %v1547
        %1612 = vst [vmem:[%s242 + $0x180] sm:$0xff] %v1548
        %1613 = vst [vmem:[%s242 + $0x188] sm:$0xff] %v1549
        %1614 = vst [vmem:[%s242 + $0x190] sm:$0xff] %v1550
        %1615 = vst [vmem:[%s242 + $0x198] sm:$0xff] %v1551
        %1616 = vst [vmem:[%s242 + $0x1a0] sm:$0xff] %v1552
        %1617 = vst [vmem:[%s242 + $0x1a8] sm:$0xff] %v1553
        %1618 = vst [vmem:[%s242 + $0x1b0] sm:$0xff] %v1554
        %1619 = vst [vmem:[%s242 + $0x1b8] sm:$0xff] %v1555
        %1620 = vst [vmem:[%s242 + $0x1c0] sm:$0xff] %v1556
        %1621 = vst [vmem:[%s242 + $0x1c8] sm:$0xff] %v1557
        %1622 = vst [vmem:[%s242 + $0x1d0] sm:$0xff] %v1558
        %1623 = vst [vmem:[%s242 + $0x1d8] sm:$0xff] %v1559
        %1624 = vst [vmem:[%s242 + $0x1e0] sm:$0xff] %v1560
        %1625 = vst [vmem:[%s242 + $0x1e8] sm:$0xff] %v1561
        %1626 = vst [vmem:[%s242 + $0x1f0] sm:$0xff] %v1562
        %1627 = vst [vmem:[%s242 + $0x1f8] sm:$0xff] %v1563
        %s1628 = sand.u32 %s153, 1
        %s1629 = scalar_lea.sflag [#allocation3], %s1628
        %s1630 = sand.u32 %s153, 1
        %s1631 = smul.addr %s1630, 512
        %s1632 = scalar_lea.vmem [#allocation2], %s1631
        // Predicated region
        $region41: #{nr_process_forward.1} parent=39 // pred_check
          %p1633 = pneg %p163
        $region42: #{nr_process_forward.1} parent=39 // pred_check_branch
          %1635 = sbr.rel (%p1633) target = $region44
        $region43: #{nr_process_forward.1} parent=39 // pred_region
          %s1636 = smul.u32 8, %s24
          %s1638 = ssub.s32 8192, 8192
          %1639 = vsyncadd %s1629, %s1638
          %s1640 = smul.addr %s23, 64
          %s1641 = sadd.s32 %s1636, %s1640
          %s1642 = smul.addr %s1641, 128
          %s1643 = scalar_lea.hbm %s5, %s1642
          %s1644 = sshll.u32 %s1632, 4
          %s1645 = int_to_ptr.vmem [resolvable:$true] %s1644
          %1650 = dma.vmem_to_hbm [thread:$0]  %s1645, 8192, %s1643, %s1629, 1024, 1024, 64
        $region44: #{nr_process_forward.1} parent=39 // pred_fallthru
          _
      $region40: #{nr_process_forward.1} parent=5 // pred_fallthru
        _
      %p1651 = scmp.le.s32.totalorder 2, %s14
      // Predicated region
      $region45: #{nr_process_forward.1} parent=5 // pred_check
        %p1652 = pneg %p1651
      $region46: #{nr_process_forward.1} parent=5 // pred_check_branch
        %1654 = sbr.rel (%p1652) target = $region48
      $region47: #{nr_process_forward.1} parent=5 // pred_region
        %s1655 = ssub.s32 %s14, 2
        // Predicated region
        $region49: #{nr_process_forward.1} parent=47 // pred_check
          %p1656 = pneg %p169
        $region50: #{nr_process_forward.1} parent=47 // pred_check_branch
          %1658 = sbr.rel (%p1656) target = $region52
        $region51: #{nr_process_forward.1} parent=47 // pred_region
          %s1659 = sand.u32 %s154, 1
          %s1660 = scalar_lea.sflag [#allocation3], %s1659
          %s1661 = sand.u32 %s154, 1
          %s1662 = smul.addr %s1661, 512
          %s1663 = scalar_lea.vmem [#allocation2], %s1662
          %1664 = dma.done %s1660, 8192
        $region52: #{nr_process_forward.1} parent=47 // pred_fallthru
          _
      $region48: #{nr_process_forward.1} parent=5 // pred_fallthru
        _
    $region6: #{nr_process_forward.1} parent=1 // loop_footer
      %s18 = sadd.s32 1, %s14
    $region7: #{nr_process_forward.1} parent=1 // loop_footer_branch
      %13 = sbr.rel target = $region3
    $region8: #{nr_process_forward.1} parent=1 // loop_exit
      _
    %1665 = vsyncpa [#allocation3], 1
    %s1666 = scalar_lea.sflag [#allocation3], 1
    %1667 = vsyncpa %s1666, 1

</llo_original>
